<compile_context>
chip_gen: v6e
topology: v6e:2x2x1
jax: 0.10.0
libtpu: 0.0.40
codegen_flags: <defaults>
</compile_context>

<pallas_src>
import jax
import jax.numpy as jnp
from jax.experimental import pallas as pl
from jax.experimental.pallas import tpu as pltpu


# Packed layout constants.
_C1P = 8      # conv1 channels padded 6 -> 8 (lane group size inside each half)
_C2P = 16     # conv2 channels (16, no padding needed)
_N1 = 256     # conv1 matmul width: 2 parities x 128 lanes (14*8 = 112 real)
_N2 = 256     # conv2 matmul width: 2 parities x 128 lanes (5*16 = 80 real)
_FCW = 128    # padded fc lane width (120 / 84 / 10 real)


# ---------------------------------------------------------------------------
# The fused kernel: one grid step == one image, everything in VMEM.
# ---------------------------------------------------------------------------
def _lenet_kernel(x_ref, b1m_ref, b1v_ref, de_ref, do_ref,
                  b2m_ref, b2v_ref, ee_ref, eo_ref,
                  f1_ref, f1b_ref, f2_ref, f2b_ref, f3_ref, f3b_ref,
                  out_ref):
    f32 = jnp.float32
    bf16 = jnp.bfloat16

    xp = x_ref[...]                                    # (32, 32) f32 padded image

    # ---- conv1 (5x5, pad 2) + bias + ReLU: 5 banded matmuls over dy --------
    acc1 = jnp.zeros((28, _N1), f32)
    for dy in range(5):
        acc1 = acc1 + jnp.dot(xp[dy:dy + 28, :].astype(bf16), b1m_ref[dy],
                              preferred_element_type=f32)
    h1 = jnp.maximum(acc1 + b1v_ref[...], 0.0)         # (28, 256)

    # ---- maxpool 2x2 #1: W-pool = aligned lane halves, H-pool = selection --
    m1 = jnp.maximum(h1[:, :128], h1[:, 128:]).astype(bf16)        # (28, 128)
    a1 = jnp.maximum(
        jnp.dot(de_ref[...], m1, preferred_element_type=f32),
        jnp.dot(do_ref[...], m1, preferred_element_type=f32))      # (14, 128)

    # ---- conv2 (5x5, no pad) + bias + ReLU ---------------------------------
    acc2 = jnp.zeros((10, _N2), f32)
    for dy in range(5):
        acc2 = acc2 + jnp.dot(a1[dy:dy + 10, :].astype(bf16), b2m_ref[dy],
                              preferred_element_type=f32)
    h2 = jnp.maximum(acc2 + b2v_ref[...], 0.0)         # (10, 256)

    # ---- maxpool 2x2 #2 -----------------------------------------------------
    m2 = jnp.maximum(h2[:, :128], h2[:, 128:]).astype(bf16)        # (10, 128)
    a2 = jnp.maximum(
        jnp.dot(ee_ref[...], m2, preferred_element_type=f32),
        jnp.dot(eo_ref[...], m2, preferred_element_type=f32))      # (5, 128)

    # ---- fc1 (+ReLU): PyTorch (C,H,W) flatten folded into packed weights ---
    z = jnp.zeros((1, _FCW), f32)
    for h in range(5):
        z = z + jnp.dot(a2[h:h + 1, :].astype(bf16), f1_ref[h],
                        preferred_element_type=f32)
    z = jnp.maximum(z + f1b_ref[...], 0.0).astype(bf16)

    # ---- fc2 (+ReLU) --------------------------------------------------------
    z = jnp.maximum(
        jnp.dot(z, f2_ref[...], preferred_element_type=f32) + f2b_ref[...],
        0.0).astype(bf16)

    # ---- fc3 ----------------------------------------------------------------
    z = jnp.dot(z, f3_ref[...], preferred_element_type=f32) + f3b_ref[...]

    out_ref[...] = z.astype(out_ref.dtype)             # (1, 128); logits in [:, :10]


# ---------------------------------------------------------------------------
# One-time parameter packing (runs once, outside the jitted forward).
# ---------------------------------------------------------------------------
def pack_lenet_params(params):
    f32 = jnp.float32
    bf16 = jnp.bfloat16

    w1 = params["conv1_w"].astype(f32)    # (6, 1, 5, 5)   PyTorch (co, ci, kh, kw)
    b1 = params["conv1_b"].astype(f32)
    w2 = params["conv2_w"].astype(f32)    # (16, 6, 5, 5)
    b2 = params["conv2_b"].astype(f32)
    wf1 = params["fc1_w"].astype(f32)     # (120, 400)     PyTorch (out, in)
    bfc1 = params["fc1_b"].astype(f32)
    wf2 = params["fc2_w"].astype(f32)     # (84, 120)
    bfc2 = params["fc2_b"].astype(f32)
    wf3 = params["fc3_w"].astype(f32)     # (10, 84)
    bfc3 = params["fc3_b"].astype(f32)

    # conv1 banded matrices B1[dy, w_in, col], col = wp*128 + w2*8 + co,
    # output pixel w_out = 2*w2 + wp, weight tap dx = w_in - w_out.
    dy = jnp.arange(5)[:, None, None]
    w_in = jnp.arange(32)[None, :, None]
    col = jnp.arange(_N1)[None, None, :]
    wp, lane = col // 128, col % 128
    w2i, co = lane // _C1P, lane % _C1P
    dx = w_in - (2 * w2i + wp)
    valid = (dx >= 0) & (dx <= 4) & (co < 6) & (w2i < 14)
    vals = w1[jnp.clip(co, 0, 5), 0, dy, jnp.clip(dx, 0, 4)]
    b1m = jnp.where(valid, vals, 0.0).astype(bf16)                 # (5, 32, 256)
    lane1 = jnp.arange(_N1) % 128
    b1v = jnp.where((lane1 % _C1P < 6) & (lane1 // _C1P < 14),
                    b1[jnp.clip(lane1 % _C1P, 0, 5)], 0.0)[None, :]

    # 0/1 even/odd row pickers for the H direction of each 2x2 pool.
    de = (jnp.arange(28)[None, :] == 2 * jnp.arange(14)[:, None]).astype(bf16)
    do = (jnp.arange(28)[None, :] == 2 * jnp.arange(14)[:, None] + 1).astype(bf16)
    ee = (jnp.arange(10)[None, :] == 2 * jnp.arange(5)[:, None]).astype(bf16)
    eo = (jnp.arange(10)[None, :] == 2 * jnp.arange(5)[:, None] + 1).astype(bf16)

    # conv2 banded matrices B2[dy, w_in*8 + ci, col], col = wp*128 + w2*16 + co2.
    rin = jnp.arange(128)[None, :, None]
    w_inp, ci = rin // _C1P, rin % _C1P
    col = jnp.arange(_N2)[None, None, :]
    wp, lane = col // 128, col % 128
    w2i, co2 = lane // _C2P, lane % _C2P
    dx = w_inp - (2 * w2i + wp)
    valid = (dx >= 0) & (dx <= 4) & (ci < 6) & (w2i < 5) & (w_inp < 14)
    vals = w2[co2, jnp.clip(ci, 0, 5), dy, jnp.clip(dx, 0, 4)]
    b2m = jnp.where(valid, vals, 0.0).astype(bf16)                 # (5, 128, 256)
    lane2 = jnp.arange(_N2) % 128
    b2v = jnp.where(lane2 // _C2P < 5, b2[lane2 % _C2P], 0.0)[None, :]

    # fc1: fold PyTorch x.view(-1, 16*5*5) ordering (c*25 + h*5 + w) into
    # F1[h, w*16 + c, out]; zero-pad to 128 output lanes.
    hh = jnp.arange(5)[:, None, None]
    rr = jnp.arange(128)[None, :, None]
    ww, cc = rr // _C2P, rr % _C2P
    oo = jnp.arange(_FCW)[None, None, :]
    feat = cc * 25 + hh * 5 + ww
    valid = (ww < 5) & (oo < 120)
    vals = wf1[jnp.clip(oo, 0, 119), jnp.clip(feat, 0, 399)]
    f1 = jnp.where(valid, vals, 0.0).astype(bf16)                  # (5, 128, 128)
    f1b = jnp.pad(bfc1, (0, _FCW - 120))[None, :]

    f2 = jnp.zeros((_FCW, _FCW), f32).at[:120, :84].set(wf2.T).astype(bf16)
    f2b = jnp.pad(bfc2, (0, _FCW - 84))[None, :]
    f3 = jnp.zeros((_FCW, _FCW), f32).at[:84, :10].set(wf3.T).astype(bf16)
    f3b = jnp.pad(bfc3, (0, _FCW - 10))[None, :]

    return dict(b1m=b1m, b1v=b1v, de=de, do=do, b2m=b2m, b2v=b2v,
                ee=ee, eo=eo, f1=f1, f1b=f1b, f2=f2, f2b=f2b, f3=f3, f3b=f3b)


# ---------------------------------------------------------------------------
# Forward wrapper: pad input, launch the fused kernel, slice real logits.
# ---------------------------------------------------------------------------
def lenet_forward(packed, x_nchw):
    n = x_nchw.shape[0]
    x = x_nchw.reshape(n, 28, 28).astype(jnp.float32)          # C == 1
    xpad = jnp.pad(x, ((0, 0), (2, 2), (2, 2)))                # conv1 padding=2

    def const_spec(shape):
        return pl.BlockSpec(shape, lambda b: (0,) * len(shape))

    out = pl.pallas_call(
        _lenet_kernel,
        out_shape=jax.ShapeDtypeStruct((n, 1, _FCW), jnp.float32),
        grid=(n,),
        in_specs=[
            pl.BlockSpec((None, 32, 32), lambda b: (b, 0, 0)),   # image (per step)
            const_spec((5, 32, _N1)),      # conv1 banded weights
            const_spec((1, _N1)),          # conv1 bias
            const_spec((14, 28)),          # pool1 even-row picker
            const_spec((14, 28)),          # pool1 odd-row picker
            const_spec((5, 128, _N2)),     # conv2 banded weights
            const_spec((1, _N2)),          # conv2 bias
            const_spec((5, 10)),           # pool2 even-row picker
            const_spec((5, 10)),           # pool2 odd-row picker
            const_spec((5, 128, _FCW)),    # fc1 (flatten folded in)
            const_spec((1, _FCW)),         # fc1 bias
            const_spec((_FCW, _FCW)),      # fc2
            const_spec((1, _FCW)),         # fc2 bias
            const_spec((_FCW, _FCW)),      # fc3
            const_spec((1, _FCW)),         # fc3 bias
        ],
        out_specs=pl.BlockSpec((None, 1, _FCW), lambda b: (b, 0, 0)),
        compiler_params=pltpu.CompilerParams(
            dimension_semantics=("parallel",)),
    )(xpad, packed["b1m"], packed["b1v"], packed["de"], packed["do"],
      packed["b2m"], packed["b2v"], packed["ee"], packed["eo"],
      packed["f1"], packed["f1b"], packed["f2"], packed["f2b"],
      packed["f3"], packed["f3b"])

    return out[:, 0, :10]                                       # (N, 10) logits


# ---------------------------------------------------------------------------
# Deterministic synthetic parameters + driver.
# ---------------------------------------------------------------------------
def init_lenet_params(key):
    ks = jax.random.split(key, 10)

    def w(k, shape, fan_in):
        return jax.random.normal(k, shape, jnp.float32) / jnp.sqrt(fan_in)

    return {
        "conv1_w": w(ks[0], (6, 1, 5, 5), 25),
        "conv1_b": w(ks[1], (6,), 25),
        "conv2_w": w(ks[2], (16, 6, 5, 5), 150),
        "conv2_b": w(ks[3], (16,), 150),
        "fc1_w": w(ks[4], (120, 400), 400),   # PyTorch (out, in) convention
        "fc1_b": w(ks[5], (120,), 400),
        "fc2_w": w(ks[6], (84, 120), 120),
        "fc2_b": w(ks[7], (84,), 120),
        "fc3_w": w(ks[8], (10, 84), 84),
        "fc3_b": w(ks[9], (10,), 84),
    }


if __name__ == "__main__":
    key = jax.random.PRNGKey(0)
    pkey, xkey = jax.random.split(key)

    params = init_lenet_params(pkey)
    packed = pack_lenet_params(params)     # one-time weight packing (outside jit)

    # LeNet's fc1 (16*5*5) implies a 28x28 single-channel input; batch = 2.
    x = jax.random.normal(xkey, (2, 1, 28, 28), jnp.float32)

    fwd = jax.jit(lenet_forward)
    out = jax.block_until_ready(fwd(packed, x))

    assert out.shape == (2, 10), out.shape
    assert out.dtype == jnp.float32
    assert bool(jnp.all(jnp.isfinite(out)))
    print("KERNEL_OK")
</pallas_src>

<mosaic_0001>
module attributes {stable_mosaic.version = 11 : i64} {
  func.func @_lenet_kernel(%arg0: i32, %arg1: memref<1x32x32xf32, #tpu.memory_space<vmem>>, %arg2: memref<5x32x256xbf16, #tpu.memory_space<vmem>>, %arg3: memref<1x256xf32, #tpu.memory_space<vmem>>, %arg4: memref<14x28xbf16, #tpu.memory_space<vmem>>, %arg5: memref<14x28xbf16, #tpu.memory_space<vmem>>, %arg6: memref<5x128x256xbf16, #tpu.memory_space<vmem>>, %arg7: memref<1x256xf32, #tpu.memory_space<vmem>>, %arg8: memref<5x10xbf16, #tpu.memory_space<vmem>>, %arg9: memref<5x10xbf16, #tpu.memory_space<vmem>>, %arg10: memref<5x128x128xbf16, #tpu.memory_space<vmem>>, %arg11: memref<1x128xf32, #tpu.memory_space<vmem>>, %arg12: memref<128x128xbf16, #tpu.memory_space<vmem>>, %arg13: memref<1x128xf32, #tpu.memory_space<vmem>>, %arg14: memref<128x128xbf16, #tpu.memory_space<vmem>>, %arg15: memref<1x128xf32, #tpu.memory_space<vmem>>, %arg16: memref<1x1x128xf32, #tpu.memory_space<vmem>>) attributes {dimension_semantics = [#tpu.dimension_semantics<parallel>], iteration_bounds = array<i64: 2>, scalar_prefetch = 0 : i64, scratch_operands = 0 : i64, tpu.core_type = #tpu.core_type<tc>, window_params = [{transform_indices = @transform_0, window_bounds = array<i64: 1, 32, 32>}, {pipeline_mode = #tpu.pipeline_mode<synchronous>, transform_indices = @transform_1, window_bounds = array<i64: 5, 32, 256>}, {pipeline_mode = #tpu.pipeline_mode<synchronous>, transform_indices = @transform_2, window_bounds = array<i64: 1, 256>}, {pipeline_mode = #tpu.pipeline_mode<synchronous>, transform_indices = @transform_3, window_bounds = array<i64: 14, 28>}, {pipeline_mode = #tpu.pipeline_mode<synchronous>, transform_indices = @transform_4, window_bounds = array<i64: 14, 28>}, {pipeline_mode = #tpu.pipeline_mode<synchronous>, transform_indices = @transform_5, window_bounds = array<i64: 5, 128, 256>}, {pipeline_mode = #tpu.pipeline_mode<synchronous>, transform_indices = @transform_6, window_bounds = array<i64: 1, 256>}, {pipeline_mode = #tpu.pipeline_mode<synchronous>, transform_indices = @transform_7, window_bounds = array<i64: 5, 10>}, {pipeline_mode = #tpu.pipeline_mode<synchronous>, transform_indices = @transform_8, window_bounds = array<i64: 5, 10>}, {pipeline_mode = #tpu.pipeline_mode<synchronous>, transform_indices = @transform_9, window_bounds = array<i64: 5, 128, 128>}, {pipeline_mode = #tpu.pipeline_mode<synchronous>, transform_indices = @transform_10, window_bounds = array<i64: 1, 128>}, {pipeline_mode = #tpu.pipeline_mode<synchronous>, transform_indices = @transform_11, window_bounds = array<i64: 128, 128>}, {pipeline_mode = #tpu.pipeline_mode<synchronous>, transform_indices = @transform_12, window_bounds = array<i64: 1, 128>}, {pipeline_mode = #tpu.pipeline_mode<synchronous>, transform_indices = @transform_13, window_bounds = array<i64: 128, 128>}, {pipeline_mode = #tpu.pipeline_mode<synchronous>, transform_indices = @transform_14, window_bounds = array<i64: 1, 128>}, {transform_indices = @transform_15, window_bounds = array<i64: 1, 1, 128>}]} {
    %c0 = arith.constant 0 : index
    %c0_0 = arith.constant 0 : index
    %c0_1 = arith.constant 0 : index
    %0 = vector.load %arg1[%c0, %c0_0, %c0_1] : memref<1x32x32xf32, #tpu.memory_space<vmem>>, vector<1x32x32xf32>
    %1 = vector.shape_cast %0 : vector<1x32x32xf32> to vector<32x32xf32>
    %cst = arith.constant 0.000000e+00 : f32
    %2 = vector.broadcast %cst : f32 to vector<28x256xf32>
    %3 = vector.extract_strided_slice %1 {offsets = [0, 0], sizes = [28, 32], strides = [1, 1]} : vector<32x32xf32> to vector<28x32xf32>
    %4 = arith.truncf %3 : vector<28x32xf32> to vector<28x32xbf16>
    %c0_2 = arith.constant 0 : index
    %c0_3 = arith.constant 0 : index
    %c0_4 = arith.constant 0 : index
    %5 = vector.load %arg2[%c0_2, %c0_3, %c0_4] : memref<5x32x256xbf16, #tpu.memory_space<vmem>>, vector<1x32x256xbf16>
    %6 = vector.shape_cast %5 : vector<1x32x256xbf16> to vector<32x256xbf16>
    %cst_5 = arith.constant dense<0.000000e+00> : vector<28x256xf32>
    %7 = tpu.matmul %4, %6, %cst_5 {dimension_numbers = #tpu.dot_dimension_numbers<[1], [0], [0], [1], [0, 0, 1, 1], [], []>} : vector<28x32xbf16>, vector<32x256xbf16>, vector<28x256xf32> -> vector<28x256xf32>
    %8 = arith.addf %2, %7 : vector<28x256xf32>
    %9 = vector.extract_strided_slice %1 {offsets = [1, 0], sizes = [28, 32], strides = [1, 1]} : vector<32x32xf32> to vector<28x32xf32>
    %10 = arith.truncf %9 : vector<28x32xf32> to vector<28x32xbf16>
    %c1 = arith.constant 1 : index
    %c0_6 = arith.constant 0 : index
    %c0_7 = arith.constant 0 : index
    %11 = vector.load %arg2[%c1, %c0_6, %c0_7] : memref<5x32x256xbf16, #tpu.memory_space<vmem>>, vector<1x32x256xbf16>
    %12 = vector.shape_cast %11 : vector<1x32x256xbf16> to vector<32x256xbf16>
    %cst_8 = arith.constant dense<0.000000e+00> : vector<28x256xf32>
    %13 = tpu.matmul %10, %12, %cst_8 {dimension_numbers = #tpu.dot_dimension_numbers<[1], [0], [0], [1], [0, 0, 1, 1], [], []>} : vector<28x32xbf16>, vector<32x256xbf16>, vector<28x256xf32> -> vector<28x256xf32>
    %14 = arith.addf %8, %13 : vector<28x256xf32>
    %15 = vector.extract_strided_slice %1 {offsets = [2, 0], sizes = [28, 32], strides = [1, 1]} : vector<32x32xf32> to vector<28x32xf32>
    %16 = arith.truncf %15 : vector<28x32xf32> to vector<28x32xbf16>
    %c2 = arith.constant 2 : index
    %c0_9 = arith.constant 0 : index
    %c0_10 = arith.constant 0 : index
    %17 = vector.load %arg2[%c2, %c0_9, %c0_10] : memref<5x32x256xbf16, #tpu.memory_space<vmem>>, vector<1x32x256xbf16>
    %18 = vector.shape_cast %17 : vector<1x32x256xbf16> to vector<32x256xbf16>
    %cst_11 = arith.constant dense<0.000000e+00> : vector<28x256xf32>
    %19 = tpu.matmul %16, %18, %cst_11 {dimension_numbers = #tpu.dot_dimension_numbers<[1], [0], [0], [1], [0, 0, 1, 1], [], []>} : vector<28x32xbf16>, vector<32x256xbf16>, vector<28x256xf32> -> vector<28x256xf32>
    %20 = arith.addf %14, %19 : vector<28x256xf32>
    %21 = vector.extract_strided_slice %1 {offsets = [3, 0], sizes = [28, 32], strides = [1, 1]} : vector<32x32xf32> to vector<28x32xf32>
    %22 = arith.truncf %21 : vector<28x32xf32> to vector<28x32xbf16>
    %c3 = arith.constant 3 : index
    %c0_12 = arith.constant 0 : index
    %c0_13 = arith.constant 0 : index
    %23 = vector.load %arg2[%c3, %c0_12, %c0_13] : memref<5x32x256xbf16, #tpu.memory_space<vmem>>, vector<1x32x256xbf16>
    %24 = vector.shape_cast %23 : vector<1x32x256xbf16> to vector<32x256xbf16>
    %cst_14 = arith.constant dense<0.000000e+00> : vector<28x256xf32>
    %25 = tpu.matmul %22, %24, %cst_14 {dimension_numbers = #tpu.dot_dimension_numbers<[1], [0], [0], [1], [0, 0, 1, 1], [], []>} : vector<28x32xbf16>, vector<32x256xbf16>, vector<28x256xf32> -> vector<28x256xf32>
    %26 = arith.addf %20, %25 : vector<28x256xf32>
    %27 = vector.extract_strided_slice %1 {offsets = [4, 0], sizes = [28, 32], strides = [1, 1]} : vector<32x32xf32> to vector<28x32xf32>
    %28 = arith.truncf %27 : vector<28x32xf32> to vector<28x32xbf16>
    %c4 = arith.constant 4 : index
    %c0_15 = arith.constant 0 : index
    %c0_16 = arith.constant 0 : index
    %29 = vector.load %arg2[%c4, %c0_15, %c0_16] : memref<5x32x256xbf16, #tpu.memory_space<vmem>>, vector<1x32x256xbf16>
    %30 = vector.shape_cast %29 : vector<1x32x256xbf16> to vector<32x256xbf16>
    %cst_17 = arith.constant dense<0.000000e+00> : vector<28x256xf32>
    %31 = tpu.matmul %28, %30, %cst_17 {dimension_numbers = #tpu.dot_dimension_numbers<[1], [0], [0], [1], [0, 0, 1, 1], [], []>} : vector<28x32xbf16>, vector<32x256xbf16>, vector<28x256xf32> -> vector<28x256xf32>
    %32 = arith.addf %26, %31 : vector<28x256xf32>
    %c0_18 = arith.constant 0 : index
    %c0_19 = arith.constant 0 : index
    %33 = vector.load %arg3[%c0_18, %c0_19] : memref<1x256xf32, #tpu.memory_space<vmem>>, vector<1x256xf32>
    %34 = vector.broadcast %33 : vector<1x256xf32> to vector<28x256xf32>
    %35 = arith.addf %32, %34 : vector<28x256xf32>
    %cst_20 = arith.constant 0.000000e+00 : f32
    %36 = vector.broadcast %cst_20 : f32 to vector<28x256xf32>
    %37 = arith.maximumf %35, %36 : vector<28x256xf32>
    %38 = vector.extract_strided_slice %37 {offsets = [0, 0], sizes = [28, 128], strides = [1, 1]} : vector<28x256xf32> to vector<28x128xf32>
    %39 = vector.extract_strided_slice %37 {offsets = [0, 128], sizes = [28, 128], strides = [1, 1]} : vector<28x256xf32> to vector<28x128xf32>
    %40 = arith.maximumf %38, %39 : vector<28x128xf32>
    %41 = arith.truncf %40 : vector<28x128xf32> to vector<28x128xbf16>
    %c0_21 = arith.constant 0 : index
    %c0_22 = arith.constant 0 : index
    %42 = vector.load %arg4[%c0_21, %c0_22] : memref<14x28xbf16, #tpu.memory_space<vmem>>, vector<14x28xbf16>
    %cst_23 = arith.constant dense<0.000000e+00> : vector<14x128xf32>
    %43 = tpu.matmul %42, %41, %cst_23 {dimension_numbers = #tpu.dot_dimension_numbers<[1], [0], [0], [1], [0, 0, 1, 1], [], []>} : vector<14x28xbf16>, vector<28x128xbf16>, vector<14x128xf32> -> vector<14x128xf32>
    %c0_24 = arith.constant 0 : index
    %c0_25 = arith.constant 0 : index
    %44 = vector.load %arg5[%c0_24, %c0_25] : memref<14x28xbf16, #tpu.memory_space<vmem>>, vector<14x28xbf16>
    %cst_26 = arith.constant dense<0.000000e+00> : vector<14x128xf32>
    %45 = tpu.matmul %44, %41, %cst_26 {dimension_numbers = #tpu.dot_dimension_numbers<[1], [0], [0], [1], [0, 0, 1, 1], [], []>} : vector<14x28xbf16>, vector<28x128xbf16>, vector<14x128xf32> -> vector<14x128xf32>
    %46 = arith.maximumf %43, %45 : vector<14x128xf32>
    %cst_27 = arith.constant 0.000000e+00 : f32
    %47 = vector.broadcast %cst_27 : f32 to vector<10x256xf32>
    %48 = vector.extract_strided_slice %46 {offsets = [0, 0], sizes = [10, 128], strides = [1, 1]} : vector<14x128xf32> to vector<10x128xf32>
    %49 = arith.truncf %48 : vector<10x128xf32> to vector<10x128xbf16>
    %c0_28 = arith.constant 0 : index
    %c0_29 = arith.constant 0 : index
    %c0_30 = arith.constant 0 : index
    %50 = vector.load %arg6[%c0_28, %c0_29, %c0_30] : memref<5x128x256xbf16, #tpu.memory_space<vmem>>, vector<1x128x256xbf16>
    %51 = vector.shape_cast %50 : vector<1x128x256xbf16> to vector<128x256xbf16>
    %cst_31 = arith.constant dense<0.000000e+00> : vector<10x256xf32>
    %52 = tpu.matmul %49, %51, %cst_31 {dimension_numbers = #tpu.dot_dimension_numbers<[1], [0], [0], [1], [0, 0, 1, 1], [], []>} : vector<10x128xbf16>, vector<128x256xbf16>, vector<10x256xf32> -> vector<10x256xf32>
    %53 = arith.addf %47, %52 : vector<10x256xf32>
    %54 = vector.extract_strided_slice %46 {offsets = [1, 0], sizes = [10, 128], strides = [1, 1]} : vector<14x128xf32> to vector<10x128xf32>
    %55 = arith.truncf %54 : vector<10x128xf32> to vector<10x128xbf16>
    %c1_32 = arith.constant 1 : index
    %c0_33 = arith.constant 0 : index
    %c0_34 = arith.constant 0 : index
    %56 = vector.load %arg6[%c1_32, %c0_33, %c0_34] : memref<5x128x256xbf16, #tpu.memory_space<vmem>>, vector<1x128x256xbf16>
    %57 = vector.shape_cast %56 : vector<1x128x256xbf16> to vector<128x256xbf16>
    %cst_35 = arith.constant dense<0.000000e+00> : vector<10x256xf32>
    %58 = tpu.matmul %55, %57, %cst_35 {dimension_numbers = #tpu.dot_dimension_numbers<[1], [0], [0], [1], [0, 0, 1, 1], [], []>} : vector<10x128xbf16>, vector<128x256xbf16>, vector<10x256xf32> -> vector<10x256xf32>
    %59 = arith.addf %53, %58 : vector<10x256xf32>
    %60 = vector.extract_strided_slice %46 {offsets = [2, 0], sizes = [10, 128], strides = [1, 1]} : vector<14x128xf32> to vector<10x128xf32>
    %61 = arith.truncf %60 : vector<10x128xf32> to vector<10x128xbf16>
    %c2_36 = arith.constant 2 : index
    %c0_37 = arith.constant 0 : index
    %c0_38 = arith.constant 0 : index
    %62 = vector.load %arg6[%c2_36, %c0_37, %c0_38] : memref<5x128x256xbf16, #tpu.memory_space<vmem>>, vector<1x128x256xbf16>
    %63 = vector.shape_cast %62 : vector<1x128x256xbf16> to vector<128x256xbf16>
    %cst_39 = arith.constant dense<0.000000e+00> : vector<10x256xf32>
    %64 = tpu.matmul %61, %63, %cst_39 {dimension_numbers = #tpu.dot_dimension_numbers<[1], [0], [0], [1], [0, 0, 1, 1], [], []>} : vector<10x128xbf16>, vector<128x256xbf16>, vector<10x256xf32> -> vector<10x256xf32>
    %65 = arith.addf %59, %64 : vector<10x256xf32>
    %66 = vector.extract_strided_slice %46 {offsets = [3, 0], sizes = [10, 128], strides = [1, 1]} : vector<14x128xf32> to vector<10x128xf32>
    %67 = arith.truncf %66 : vector<10x128xf32> to vector<10x128xbf16>
    %c3_40 = arith.constant 3 : index
    %c0_41 = arith.constant 0 : index
    %c0_42 = arith.constant 0 : index
    %68 = vector.load %arg6[%c3_40, %c0_41, %c0_42] : memref<5x128x256xbf16, #tpu.memory_space<vmem>>, vector<1x128x256xbf16>
    %69 = vector.shape_cast %68 : vector<1x128x256xbf16> to vector<128x256xbf16>
    %cst_43 = arith.constant dense<0.000000e+00> : vector<10x256xf32>
    %70 = tpu.matmul %67, %69, %cst_43 {dimension_numbers = #tpu.dot_dimension_numbers<[1], [0], [0], [1], [0, 0, 1, 1], [], []>} : vector<10x128xbf16>, vector<128x256xbf16>, vector<10x256xf32> -> vector<10x256xf32>
    %71 = arith.addf %65, %70 : vector<10x256xf32>
    %72 = vector.extract_strided_slice %46 {offsets = [4, 0], sizes = [10, 128], strides = [1, 1]} : vector<14x128xf32> to vector<10x128xf32>
    %73 = arith.truncf %72 : vector<10x128xf32> to vector<10x128xbf16>
    %c4_44 = arith.constant 4 : index
    %c0_45 = arith.constant 0 : index
    %c0_46 = arith.constant 0 : index
    %74 = vector.load %arg6[%c4_44, %c0_45, %c0_46] : memref<5x128x256xbf16, #tpu.memory_space<vmem>>, vector<1x128x256xbf16>
    %75 = vector.shape_cast %74 : vector<1x128x256xbf16> to vector<128x256xbf16>
    %cst_47 = arith.constant dense<0.000000e+00> : vector<10x256xf32>
    %76 = tpu.matmul %73, %75, %cst_47 {dimension_numbers = #tpu.dot_dimension_numbers<[1], [0], [0], [1], [0, 0, 1, 1], [], []>} : vector<10x128xbf16>, vector<128x256xbf16>, vector<10x256xf32> -> vector<10x256xf32>
    %77 = arith.addf %71, %76 : vector<10x256xf32>
    %c0_48 = arith.constant 0 : index
    %c0_49 = arith.constant 0 : index
    %78 = vector.load %arg7[%c0_48, %c0_49] : memref<1x256xf32, #tpu.memory_space<vmem>>, vector<1x256xf32>
    %79 = vector.broadcast %78 : vector<1x256xf32> to vector<10x256xf32>
    %80 = arith.addf %77, %79 : vector<10x256xf32>
    %cst_50 = arith.constant 0.000000e+00 : f32
    %81 = vector.broadcast %cst_50 : f32 to vector<10x256xf32>
    %82 = arith.maximumf %80, %81 : vector<10x256xf32>
    %83 = vector.extract_strided_slice %82 {offsets = [0, 0], sizes = [10, 128], strides = [1, 1]} : vector<10x256xf32> to vector<10x128xf32>
    %84 = vector.extract_strided_slice %82 {offsets = [0, 128], sizes = [10, 128], strides = [1, 1]} : vector<10x256xf32> to vector<10x128xf32>
    %85 = arith.maximumf %83, %84 : vector<10x128xf32>
    %86 = arith.truncf %85 : vector<10x128xf32> to vector<10x128xbf16>
    %c0_51 = arith.constant 0 : index
    %c0_52 = arith.constant 0 : index
    %87 = vector.load %arg8[%c0_51, %c0_52] : memref<5x10xbf16, #tpu.memory_space<vmem>>, vector<5x10xbf16>
    %cst_53 = arith.constant dense<0.000000e+00> : vector<5x128xf32>
    %88 = tpu.matmul %87, %86, %cst_53 {dimension_numbers = #tpu.dot_dimension_numbers<[1], [0], [0], [1], [0, 0, 1, 1], [], []>} : vector<5x10xbf16>, vector<10x128xbf16>, vector<5x128xf32> -> vector<5x128xf32>
    %c0_54 = arith.constant 0 : index
    %c0_55 = arith.constant 0 : index
    %89 = vector.load %arg9[%c0_54, %c0_55] : memref<5x10xbf16, #tpu.memory_space<vmem>>, vector<5x10xbf16>
    %cst_56 = arith.constant dense<0.000000e+00> : vector<5x128xf32>
    %90 = tpu.matmul %89, %86, %cst_56 {dimension_numbers = #tpu.dot_dimension_numbers<[1], [0], [0], [1], [0, 0, 1, 1], [], []>} : vector<5x10xbf16>, vector<10x128xbf16>, vector<5x128xf32> -> vector<5x128xf32>
    %91 = arith.maximumf %88, %90 : vector<5x128xf32>
    %cst_57 = arith.constant 0.000000e+00 : f32
    %92 = vector.broadcast %cst_57 : f32 to vector<1x128xf32>
    %93 = vector.extract_strided_slice %91 {offsets = [0, 0], sizes = [1, 128], strides = [1, 1]} : vector<5x128xf32> to vector<1x128xf32>
    %94 = arith.truncf %93 : vector<1x128xf32> to vector<1x128xbf16>
    %c0_58 = arith.constant 0 : index
    %c0_59 = arith.constant 0 : index
    %c0_60 = arith.constant 0 : index
    %95 = vector.load %arg10[%c0_58, %c0_59, %c0_60] : memref<5x128x128xbf16, #tpu.memory_space<vmem>>, vector<1x128x128xbf16>
    %96 = vector.shape_cast %95 : vector<1x128x128xbf16> to vector<128x128xbf16>
    %cst_61 = arith.constant dense<0.000000e+00> : vector<1x128xf32>
    %97 = tpu.matmul %94, %96, %cst_61 {dimension_numbers = #tpu.dot_dimension_numbers<[1], [0], [0], [1], [0, 0, 1, 1], [], []>} : vector<1x128xbf16>, vector<128x128xbf16>, vector<1x128xf32> -> vector<1x128xf32>
    %98 = arith.addf %92, %97 : vector<1x128xf32>
    %99 = vector.extract_strided_slice %91 {offsets = [1, 0], sizes = [1, 128], strides = [1, 1]} : vector<5x128xf32> to vector<1x128xf32>
    %100 = arith.truncf %99 : vector<1x128xf32> to vector<1x128xbf16>
    %c1_62 = arith.constant 1 : index
    %c0_63 = arith.constant 0 : index
    %c0_64 = arith.constant 0 : index
    %101 = vector.load %arg10[%c1_62, %c0_63, %c0_64] : memref<5x128x128xbf16, #tpu.memory_space<vmem>>, vector<1x128x128xbf16>
    %102 = vector.shape_cast %101 : vector<1x128x128xbf16> to vector<128x128xbf16>
    %cst_65 = arith.constant dense<0.000000e+00> : vector<1x128xf32>
    %103 = tpu.matmul %100, %102, %cst_65 {dimension_numbers = #tpu.dot_dimension_numbers<[1], [0], [0], [1], [0, 0, 1, 1], [], []>} : vector<1x128xbf16>, vector<128x128xbf16>, vector<1x128xf32> -> vector<1x128xf32>
    %104 = arith.addf %98, %103 : vector<1x128xf32>
    %105 = vector.extract_strided_slice %91 {offsets = [2, 0], sizes = [1, 128], strides = [1, 1]} : vector<5x128xf32> to vector<1x128xf32>
    %106 = arith.truncf %105 : vector<1x128xf32> to vector<1x128xbf16>
    %c2_66 = arith.constant 2 : index
    %c0_67 = arith.constant 0 : index
    %c0_68 = arith.constant 0 : index
    %107 = vector.load %arg10[%c2_66, %c0_67, %c0_68] : memref<5x128x128xbf16, #tpu.memory_space<vmem>>, vector<1x128x128xbf16>
    %108 = vector.shape_cast %107 : vector<1x128x128xbf16> to vector<128x128xbf16>
    %cst_69 = arith.constant dense<0.000000e+00> : vector<1x128xf32>
    %109 = tpu.matmul %106, %108, %cst_69 {dimension_numbers = #tpu.dot_dimension_numbers<[1], [0], [0], [1], [0, 0, 1, 1], [], []>} : vector<1x128xbf16>, vector<128x128xbf16>, vector<1x128xf32> -> vector<1x128xf32>
    %110 = arith.addf %104, %109 : vector<1x128xf32>
    %111 = vector.extract_strided_slice %91 {offsets = [3, 0], sizes = [1, 128], strides = [1, 1]} : vector<5x128xf32> to vector<1x128xf32>
    %112 = arith.truncf %111 : vector<1x128xf32> to vector<1x128xbf16>
    %c3_70 = arith.constant 3 : index
    %c0_71 = arith.constant 0 : index
    %c0_72 = arith.constant 0 : index
    %113 = vector.load %arg10[%c3_70, %c0_71, %c0_72] : memref<5x128x128xbf16, #tpu.memory_space<vmem>>, vector<1x128x128xbf16>
    %114 = vector.shape_cast %113 : vector<1x128x128xbf16> to vector<128x128xbf16>
    %cst_73 = arith.constant dense<0.000000e+00> : vector<1x128xf32>
    %115 = tpu.matmul %112, %114, %cst_73 {dimension_numbers = #tpu.dot_dimension_numbers<[1], [0], [0], [1], [0, 0, 1, 1], [], []>} : vector<1x128xbf16>, vector<128x128xbf16>, vector<1x128xf32> -> vector<1x128xf32>
    %116 = arith.addf %110, %115 : vector<1x128xf32>
    %117 = vector.extract_strided_slice %91 {offsets = [4, 0], sizes = [1, 128], strides = [1, 1]} : vector<5x128xf32> to vector<1x128xf32>
    %118 = arith.truncf %117 : vector<1x128xf32> to vector<1x128xbf16>
    %c4_74 = arith.constant 4 : index
    %c0_75 = arith.constant 0 : index
    %c0_76 = arith.constant 0 : index
    %119 = vector.load %arg10[%c4_74, %c0_75, %c0_76] : memref<5x128x128xbf16, #tpu.memory_space<vmem>>, vector<1x128x128xbf16>
    %120 = vector.shape_cast %119 : vector<1x128x128xbf16> to vector<128x128xbf16>
    %cst_77 = arith.constant dense<0.000000e+00> : vector<1x128xf32>
    %121 = tpu.matmul %118, %120, %cst_77 {dimension_numbers = #tpu.dot_dimension_numbers<[1], [0], [0], [1], [0, 0, 1, 1], [], []>} : vector<1x128xbf16>, vector<128x128xbf16>, vector<1x128xf32> -> vector<1x128xf32>
    %122 = arith.addf %116, %121 : vector<1x128xf32>
    %c0_78 = arith.constant 0 : index
    %c0_79 = arith.constant 0 : index
    %123 = vector.load %arg11[%c0_78, %c0_79] : memref<1x128xf32, #tpu.memory_space<vmem>>, vector<1x128xf32>
    %124 = arith.addf %122, %123 : vector<1x128xf32>
    %cst_80 = arith.constant 0.000000e+00 : f32
    %125 = vector.broadcast %cst_80 : f32 to vector<1x128xf32>
    %126 = arith.maximumf %124, %125 : vector<1x128xf32>
    %127 = arith.truncf %126 : vector<1x128xf32> to vector<1x128xbf16>
    %c0_81 = arith.constant 0 : index
    %c0_82 = arith.constant 0 : index
    %128 = vector.load %arg12[%c0_81, %c0_82] : memref<128x128xbf16, #tpu.memory_space<vmem>>, vector<128x128xbf16>
    %cst_83 = arith.constant dense<0.000000e+00> : vector<1x128xf32>
    %129 = tpu.matmul %127, %128, %cst_83 {dimension_numbers = #tpu.dot_dimension_numbers<[1], [0], [0], [1], [0, 0, 1, 1], [], []>} : vector<1x128xbf16>, vector<128x128xbf16>, vector<1x128xf32> -> vector<1x128xf32>
    %c0_84 = arith.constant 0 : index
    %c0_85 = arith.constant 0 : index
    %130 = vector.load %arg13[%c0_84, %c0_85] : memref<1x128xf32, #tpu.memory_space<vmem>>, vector<1x128xf32>
    %131 = arith.addf %129, %130 : vector<1x128xf32>
    %cst_86 = arith.constant 0.000000e+00 : f32
    %132 = vector.broadcast %cst_86 : f32 to vector<1x128xf32>
    %133 = arith.maximumf %131, %132 : vector<1x128xf32>
    %134 = arith.truncf %133 : vector<1x128xf32> to vector<1x128xbf16>
    %c0_87 = arith.constant 0 : index
    %c0_88 = arith.constant 0 : index
    %135 = vector.load %arg14[%c0_87, %c0_88] : memref<128x128xbf16, #tpu.memory_space<vmem>>, vector<128x128xbf16>
    %cst_89 = arith.constant dense<0.000000e+00> : vector<1x128xf32>
    %136 = tpu.matmul %134, %135, %cst_89 {dimension_numbers = #tpu.dot_dimension_numbers<[1], [0], [0], [1], [0, 0, 1, 1], [], []>} : vector<1x128xbf16>, vector<128x128xbf16>, vector<1x128xf32> -> vector<1x128xf32>
    %c0_90 = arith.constant 0 : index
    %c0_91 = arith.constant 0 : index
    %137 = vector.load %arg15[%c0_90, %c0_91] : memref<1x128xf32, #tpu.memory_space<vmem>>, vector<1x128xf32>
    %138 = arith.addf %136, %137 : vector<1x128xf32>
    %c0_92 = arith.constant 0 : index
    %c0_93 = arith.constant 0 : index
    %c0_94 = arith.constant 0 : index
    %139 = vector.load %arg16[%c0_92, %c0_93, %c0_94] : memref<1x1x128xf32, #tpu.memory_space<vmem>>, vector<1x1x128xf32>
    %140 = vector.shape_cast %139 : vector<1x1x128xf32> to vector<1x128xf32>
    %141 = vector.shape_cast %138 : vector<1x128xf32> to vector<1x1x128xf32>
    tpu.vector_store %arg16[%c0_92, %c0_93, %c0_94], %141 {strides = array<i32>} : memref<1x1x128xf32, #tpu.memory_space<vmem>>, vector<1x1x128xf32>,
    return
  }
  func.func @transform_0(%arg0: i32) -> (i32, i32, i32) {
    %c0_i32 = arith.constant 0 : i32
    %c0_i32_0 = arith.constant 0 : i32
    %c0_i32_1 = arith.constant 0 : i32
    return %arg0, %c0_i32, %c0_i32_0 : i32, i32, i32
  }
  func.func @transform_1(%arg0: i32) -> (i32, i32, i32) {
    %c0_i32 = arith.constant 0 : i32
    %c0_i32_0 = arith.constant 0 : i32
    %c0_i32_1 = arith.constant 0 : i32
    %c0_i32_2 = arith.constant 0 : i32
    return %c0_i32, %c0_i32_0, %c0_i32_1 : i32, i32, i32
  }
  func.func @transform_2(%arg0: i32) -> (i32, i32) {
    %c0_i32 = arith.constant 0 : i32
    %c0_i32_0 = arith.constant 0 : i32
    %c0_i32_1 = arith.constant 0 : i32
    return %c0_i32, %c0_i32_0 : i32, i32
  }
  func.func @transform_3(%arg0: i32) -> (i32, i32) {
    %c0_i32 = arith.constant 0 : i32
    %c0_i32_0 = arith.constant 0 : i32
    %c0_i32_1 = arith.constant 0 : i32
    return %c0_i32, %c0_i32_0 : i32, i32
  }
  func.func @transform_4(%arg0: i32) -> (i32, i32) {
    %c0_i32 = arith.constant 0 : i32
    %c0_i32_0 = arith.constant 0 : i32
    %c0_i32_1 = arith.constant 0 : i32
    return %c0_i32, %c0_i32_0 : i32, i32
  }
  func.func @transform_5(%arg0: i32) -> (i32, i32, i32) {
    %c0_i32 = arith.constant 0 : i32
    %c0_i32_0 = arith.constant 0 : i32
    %c0_i32_1 = arith.constant 0 : i32
    %c0_i32_2 = arith.constant 0 : i32
    return %c0_i32, %c0_i32_0, %c0_i32_1 : i32, i32, i32
  }
  func.func @transform_6(%arg0: i32) -> (i32, i32) {
    %c0_i32 = arith.constant 0 : i32
    %c0_i32_0 = arith.constant 0 : i32
    %c0_i32_1 = arith.constant 0 : i32
    return %c0_i32, %c0_i32_0 : i32, i32
  }
  func.func @transform_7(%arg0: i32) -> (i32, i32) {
    %c0_i32 = arith.constant 0 : i32
    %c0_i32_0 = arith.constant 0 : i32
    %c0_i32_1 = arith.constant 0 : i32
    return %c0_i32, %c0_i32_0 : i32, i32
  }
  func.func @transform_8(%arg0: i32) -> (i32, i32) {
    %c0_i32 = arith.constant 0 : i32
    %c0_i32_0 = arith.constant 0 : i32
    %c0_i32_1 = arith.constant 0 : i32
    return %c0_i32, %c0_i32_0 : i32, i32
  }
  func.func @transform_9(%arg0: i32) -> (i32, i32, i32) {
    %c0_i32 = arith.constant 0 : i32
    %c0_i32_0 = arith.constant 0 : i32
    %c0_i32_1 = arith.constant 0 : i32
    %c0_i32_2 = arith.constant 0 : i32
    return %c0_i32, %c0_i32_0, %c0_i32_1 : i32, i32, i32
  }
  func.func @transform_10(%arg0: i32) -> (i32, i32) {
    %c0_i32 = arith.constant 0 : i32
    %c0_i32_0 = arith.constant 0 : i32
    %c0_i32_1 = arith.constant 0 : i32
    return %c0_i32, %c0_i32_0 : i32, i32
  }
  func.func @transform_11(%arg0: i32) -> (i32, i32) {
    %c0_i32 = arith.constant 0 : i32
    %c0_i32_0 = arith.constant 0 : i32
    %c0_i32_1 = arith.constant 0 : i32
    return %c0_i32, %c0_i32_0 : i32, i32
  }
  func.func @transform_12(%arg0: i32) -> (i32, i32) {
    %c0_i32 = arith.constant 0 : i32
    %c0_i32_0 = arith.constant 0 : i32
    %c0_i32_1 = arith.constant 0 : i32
    return %c0_i32, %c0_i32_0 : i32, i32
  }
  func.func @transform_13(%arg0: i32) -> (i32, i32) {
    %c0_i32 = arith.constant 0 : i32
    %c0_i32_0 = arith.constant 0 : i32
    %c0_i32_1 = arith.constant 0 : i32
    return %c0_i32, %c0_i32_0 : i32, i32
  }
  func.func @transform_14(%arg0: i32) -> (i32, i32) {
    %c0_i32 = arith.constant 0 : i32
    %c0_i32_0 = arith.constant 0 : i32
    %c0_i32_1 = arith.constant 0 : i32
    return %c0_i32, %c0_i32_0 : i32, i32
  }
  func.func @transform_15(%arg0: i32) -> (i32, i32, i32) {
    %c0_i32 = arith.constant 0 : i32
    %c0_i32_0 = arith.constant 0 : i32
    %c0_i32_1 = arith.constant 0 : i32
    return %arg0, %c0_i32, %c0_i32_0 : i32, i32, i32
  }
}

</mosaic_0001>

<llo_original>
// kernel: lenet_forward.1
$region0: #{lenet_forward.1}
  #allocation0 [shape = 'u32[]', space=smem, size = 0x4, offset = 0x4, fixed_abs, tag = 'smem constant byte address 0x4 - core index']
  #allocation1 [shape = 'u32[144,128]{1,0:T(1,128)}', space=vmem, size = 0x12000, scoped, tag = 'internal scratch']
  %s0 = inlined_call_operand.vmem [shape: f32[2,32,32], index: 0, kind: input, shape index: {}]
  %s1 = inlined_call_operand.hbm [shape: bf16[5,32,256], index: 1, kind: input, shape index: {}]
  %s2 = inlined_call_operand.vmem [shape: f32[1,256], index: 2, kind: input, shape index: {}]
  %s3 = inlined_call_operand.vmem [shape: bf16[14,28], index: 3, kind: input, shape index: {}]
  %s4 = inlined_call_operand.vmem [shape: bf16[14,28], index: 4, kind: input, shape index: {}]
  %s5 = inlined_call_operand.hbm [shape: bf16[5,128,256], index: 5, kind: input, shape index: {}]
  %s6 = inlined_call_operand.vmem [shape: f32[1,256], index: 6, kind: input, shape index: {}]
  %s7 = inlined_call_operand.vmem [shape: bf16[5,10], index: 7, kind: input, shape index: {}]
  %s8 = inlined_call_operand.vmem [shape: bf16[5,10], index: 8, kind: input, shape index: {}]
  %s9 = inlined_call_operand.vmem [shape: bf16[5,128,128], index: 9, kind: input, shape index: {}]
  %s10 = inlined_call_operand.vmem [shape: f32[1,128], index: 10, kind: input, shape index: {}]
  %s11 = inlined_call_operand.hbm [shape: bf16[128,128], index: 11, kind: input, shape index: {}]
  %s12 = inlined_call_operand.vmem [shape: f32[1,128], index: 12, kind: input, shape index: {}]
  %s13 = inlined_call_operand.hbm [shape: bf16[128,128], index: 13, kind: input, shape index: {}]
  %s14 = inlined_call_operand.vmem [shape: f32[1,128], index: 14, kind: input, shape index: {}]
  %s15 = inlined_call_operand.hbm [shape: f32[2,1,128], index: 15, kind: output, shape index: {}]
  %s16 = sld [smem:[#allocation0]]
  $region109: #{lenet_forward.1} parent=0
    _
  %s18 = ssub.s32 1, %s16
  %s19 = scalar_select 0, %s18, %s16
  $region1: #{lenet_forward.1} parent=0
    #allocation2 [shape = 'u8[81920]{0}', space=vmem, size = 0x14000, scoped, tag = 'input window, operand 1, single buffered']
    #allocation3 [shape = 's32[2]{0}', space=sflag, size = 0x8, scoped, tag = 'scoped memory for lenet_forward.1']
    #allocation4 [shape = 's32[2]{0}', space=sflag, size = 0x8, scoped, tag = 'scoped memory for lenet_forward.1']
    #allocation5 [shape = 'u8[327680]{0}', space=vmem, size = 0x50000, scoped, tag = 'input window, operand 5, single buffered']
    #allocation6 [shape = 's32[1]{0}', space=sflag, size = 0x4, scoped, tag = 'scoped memory for lenet_forward.1']
    #allocation7 [shape = 'u8[32768]{0}', space=vmem, size = 0x8000, scoped, tag = 'input window, operand 11, single buffered']
    #allocation8 [shape = 'u8[32768]{0}', space=vmem, size = 0x8000, scoped, tag = 'input window, operand 13, single buffered']
    #allocation9 [shape = 's32[1]{0}', space=sflag, size = 0x4, scoped, tag = 'scoped memory for lenet_forward.1']
    #allocation10 [shape = 'u8[1024]{0}', space=vmem, size = 0x400, scoped, tag = 'output window, operand 0']
    %20 = vsyncpa [#allocation3], 0
    %21 = vsyncpa [#allocation6], 0
    %22 = vsyncpa [#allocation9], 0
    %23 = vsyncpa [#allocation4], 0
    %s24 = scalar_lea.sflag [#allocation4], 1
    %25 = vsyncpa %s24, 0
    loop: start=0, step=1, limit=4
    $region2: #{lenet_forward.1} parent=1 // loop_pre_header
      _
    $region3: #{lenet_forward.1} parent=1 // loop_header
      %s27 = sphi 0, %s31
      %p28 = scmp.ge.s32.totalorder %s27, 4
      %s37 = sphi 0, %s39
      %s40 = sphi 0, %s37
      %s41 = sphi 0, %s40
      %s57 = sphi 0, %s41
      %s61 = sphi 0, %s61
      %s63 = sphi 0, %s61
      %s64 = sphi 0, %s63
      %s78 = sphi 0, %s64
      %s82 = sphi 0, %s82
      %s84 = sphi 0, %s82
      %s85 = sphi 0, %s84
      %s99 = sphi 0, %s85
      %s103 = sphi 0, %s103
      %s105 = sphi 0, %s103
      %s106 = sphi 0, %s105
      %s120 = sphi 0, %s106
      %s124 = sphi 0, %s124
      %s126 = sphi 0, %s124
      %s127 = sphi 0, %s126
      %s141 = sphi 0, %s127
      %s145 = sphi 0, %s145
      %s147 = sphi 0, %s145
      %s148 = sphi 0, %s147
      %s162 = sphi 0, %s148
      %s166 = sphi 0, %s166
      %s168 = sphi 0, %s166
      %s169 = sphi 0, %s168
      %s183 = sphi 0, %s169
      %s187 = sphi 0, %s187
      %s189 = sphi 0, %s187
      %s190 = sphi 0, %s189
      %s204 = sphi 0, %s190
      %s208 = sphi 0, %s208
      %s210 = sphi 0, %s208
      %s211 = sphi 0, %s210
      %s225 = sphi 0, %s211
      %s229 = sphi 0, %s229
      %s231 = sphi 0, %s229
      %s232 = sphi 0, %s231
      %s246 = sphi 0, %s232
      %s250 = sphi 0, %s250
      %s252 = sphi 0, %s250
      %s253 = sphi 0, %s252
      %s267 = sphi 0, %s253
      %s271 = sphi 0, %s271
      %s273 = sphi 0, %s271
      %s274 = sphi 0, %s273
      %s288 = sphi 0, %s274
      %s292 = sphi 0, %s292
      %s294 = sphi 0, %s292
      %s295 = sphi 0, %s294
      %s309 = sphi 0, %s295
      %s313 = sphi 0, %s313
      %s315 = sphi 0, %s313
      %s316 = sphi 0, %s315
      %s330 = sphi 0, %s316
      %s334 = sphi 0, %s334
      %s336 = sphi 0, %s334
      %s337 = sphi 0, %s336
      %s351 = sphi 0, %s337
      %s357 = sphi 0, %s359
      %s360 = sphi 0, %s357
      %s361 = sphi 0, %s360
      %s377 = sphi 0, %s361
    $region4: #{lenet_forward.1} parent=1 // loop_header_branch
      %30 = sbr.rel (%p28) target = $region8
    $region5: #{lenet_forward.1} parent=1 // loop_body
      %s32 = ssub.s32 %s27, 1
      %s33 = ssub.s32 %s27, 2
      %s34 = sadd.s32 %s27, 1
      %s35 = ssub.s32 %s27, %s34
      %p36 = scmp.eq.s32.totalorder %s35, 0
      %s38 = sadd.s32 %s37, 1
      %s39 = scalar_select %p36, %s37, %s38
      %p42 = pneg %p36
      %p43 = scmp.eq.s32.totalorder %s27, 1
      %p44 = por %p42, %p43
      %p45 = scmp.ne.s32.totalorder %s37, %s40
      %p46 = scmp.eq.s32.totalorder %s27, 0
      %p47 = por %p45, %p46
      %p48 = scmp.ne.s32.totalorder %s37, %s40
      %p49 = scmp.eq.s32.totalorder %s32, 1
      %p50 = por %p48, %p49
      %p51 = scmp.ne.s32.totalorder %s40, %s41
      %p52 = scmp.eq.s32.totalorder %s32, 0
      %p53 = por %p51, %p52
      %p54 = scmp.ne.s32.totalorder %s40, %s41
      %p55 = scmp.eq.s32.totalorder %s33, 1
      %p56 = por %p54, %p55
      %p58 = scmp.ne.s32.totalorder %s41, %s57
      %p59 = scmp.eq.s32.totalorder %s33, 0
      %p60 = por %p58, %p59
      %s62 = sadd.s32 %s61, 1
      %p65 = scmp.eq.s32.totalorder %s27, 1
      %p66 = scmp.ne.s32.totalorder %s61, %s63
      %p67 = scmp.eq.s32.totalorder %s27, 0
      %p68 = por %p66, %p67
      %p69 = scmp.ne.s32.totalorder %s61, %s63
      %p70 = scmp.eq.s32.totalorder %s32, 1
      %p71 = por %p69, %p70
      %p72 = scmp.ne.s32.totalorder %s63, %s64
      %p73 = scmp.eq.s32.totalorder %s32, 0
      %p74 = por %p72, %p73
      %p75 = scmp.ne.s32.totalorder %s63, %s64
      %p76 = scmp.eq.s32.totalorder %s33, 1
      %p77 = por %p75, %p76
      %p79 = scmp.ne.s32.totalorder %s64, %s78
      %p80 = scmp.eq.s32.totalorder %s33, 0
      %p81 = por %p79, %p80
      %s83 = sadd.s32 %s82, 1
      %p86 = scmp.eq.s32.totalorder %s27, 1
      %p87 = scmp.ne.s32.totalorder %s82, %s84
      %p88 = scmp.eq.s32.totalorder %s27, 0
      %p89 = por %p87, %p88
      %p90 = scmp.ne.s32.totalorder %s82, %s84
      %p91 = scmp.eq.s32.totalorder %s32, 1
      %p92 = por %p90, %p91
      %p93 = scmp.ne.s32.totalorder %s84, %s85
      %p94 = scmp.eq.s32.totalorder %s32, 0
      %p95 = por %p93, %p94
      %p96 = scmp.ne.s32.totalorder %s84, %s85
      %p97 = scmp.eq.s32.totalorder %s33, 1
      %p98 = por %p96, %p97
      %p100 = scmp.ne.s32.totalorder %s85, %s99
      %p101 = scmp.eq.s32.totalorder %s33, 0
      %p102 = por %p100, %p101
      %s104 = sadd.s32 %s103, 1
      %p107 = scmp.eq.s32.totalorder %s27, 1
      %p108 = scmp.ne.s32.totalorder %s103, %s105
      %p109 = scmp.eq.s32.totalorder %s27, 0
      %p110 = por %p108, %p109
      %p111 = scmp.ne.s32.totalorder %s103, %s105
      %p112 = scmp.eq.s32.totalorder %s32, 1
      %p113 = por %p111, %p112
      %p114 = scmp.ne.s32.totalorder %s105, %s106
      %p115 = scmp.eq.s32.totalorder %s32, 0
      %p116 = por %p114, %p115
      %p117 = scmp.ne.s32.totalorder %s105, %s106
      %p118 = scmp.eq.s32.totalorder %s33, 1
      %p119 = por %p117, %p118
      %p121 = scmp.ne.s32.totalorder %s106, %s120
      %p122 = scmp.eq.s32.totalorder %s33, 0
      %p123 = por %p121, %p122
      %s125 = sadd.s32 %s124, 1
      %p128 = scmp.eq.s32.totalorder %s27, 1
      %p129 = scmp.ne.s32.totalorder %s124, %s126
      %p130 = scmp.eq.s32.totalorder %s27, 0
      %p131 = por %p129, %p130
      %p132 = scmp.ne.s32.totalorder %s124, %s126
      %p133 = scmp.eq.s32.totalorder %s32, 1
      %p134 = por %p132, %p133
      %p135 = scmp.ne.s32.totalorder %s126, %s127
      %p136 = scmp.eq.s32.totalorder %s32, 0
      %p137 = por %p135, %p136
      %p138 = scmp.ne.s32.totalorder %s126, %s127
      %p139 = scmp.eq.s32.totalorder %s33, 1
      %p140 = por %p138, %p139
      %p142 = scmp.ne.s32.totalorder %s127, %s141
      %p143 = scmp.eq.s32.totalorder %s33, 0
      %p144 = por %p142, %p143
      %s146 = sadd.s32 %s145, 1
      %p149 = scmp.eq.s32.totalorder %s27, 1
      %p150 = scmp.ne.s32.totalorder %s145, %s147
      %p151 = scmp.eq.s32.totalorder %s27, 0
      %p152 = por %p150, %p151
      %p153 = scmp.ne.s32.totalorder %s145, %s147
      %p154 = scmp.eq.s32.totalorder %s32, 1
      %p155 = por %p153, %p154
      %p156 = scmp.ne.s32.totalorder %s147, %s148
      %p157 = scmp.eq.s32.totalorder %s32, 0
      %p158 = por %p156, %p157
      %p159 = scmp.ne.s32.totalorder %s147, %s148
      %p160 = scmp.eq.s32.totalorder %s33, 1
      %p161 = por %p159, %p160
      %p163 = scmp.ne.s32.totalorder %s148, %s162
      %p164 = scmp.eq.s32.totalorder %s33, 0
      %p165 = por %p163, %p164
      %s167 = sadd.s32 %s166, 1
      %p170 = scmp.eq.s32.totalorder %s27, 1
      %p171 = scmp.ne.s32.totalorder %s166, %s168
      %p172 = scmp.eq.s32.totalorder %s27, 0
      %p173 = por %p171, %p172
      %p174 = scmp.ne.s32.totalorder %s166, %s168
      %p175 = scmp.eq.s32.totalorder %s32, 1
      %p176 = por %p174, %p175
      %p177 = scmp.ne.s32.totalorder %s168, %s169
      %p178 = scmp.eq.s32.totalorder %s32, 0
      %p179 = por %p177, %p178
      %p180 = scmp.ne.s32.totalorder %s168, %s169
      %p181 = scmp.eq.s32.totalorder %s33, 1
      %p182 = por %p180, %p181
      %p184 = scmp.ne.s32.totalorder %s169, %s183
      %p185 = scmp.eq.s32.totalorder %s33, 0
      %p186 = por %p184, %p185
      %s188 = sadd.s32 %s187, 1
      %p191 = scmp.eq.s32.totalorder %s27, 1
      %p192 = scmp.ne.s32.totalorder %s187, %s189
      %p193 = scmp.eq.s32.totalorder %s27, 0
      %p194 = por %p192, %p193
      %p195 = scmp.ne.s32.totalorder %s187, %s189
      %p196 = scmp.eq.s32.totalorder %s32, 1
      %p197 = por %p195, %p196
      %p198 = scmp.ne.s32.totalorder %s189, %s190
      %p199 = scmp.eq.s32.totalorder %s32, 0
      %p200 = por %p198, %p199
      %p201 = scmp.ne.s32.totalorder %s189, %s190
      %p202 = scmp.eq.s32.totalorder %s33, 1
      %p203 = por %p201, %p202
      %p205 = scmp.ne.s32.totalorder %s190, %s204
      %p206 = scmp.eq.s32.totalorder %s33, 0
      %p207 = por %p205, %p206
      %s209 = sadd.s32 %s208, 1
      %p212 = scmp.eq.s32.totalorder %s27, 1
      %p213 = scmp.ne.s32.totalorder %s208, %s210
      %p214 = scmp.eq.s32.totalorder %s27, 0
      %p215 = por %p213, %p214
      %p216 = scmp.ne.s32.totalorder %s208, %s210
      %p217 = scmp.eq.s32.totalorder %s32, 1
      %p218 = por %p216, %p217
      %p219 = scmp.ne.s32.totalorder %s210, %s211
      %p220 = scmp.eq.s32.totalorder %s32, 0
      %p221 = por %p219, %p220
      %p222 = scmp.ne.s32.totalorder %s210, %s211
      %p223 = scmp.eq.s32.totalorder %s33, 1
      %p224 = por %p222, %p223
      %p226 = scmp.ne.s32.totalorder %s211, %s225
      %p227 = scmp.eq.s32.totalorder %s33, 0
      %p228 = por %p226, %p227
      %s230 = sadd.s32 %s229, 1
      %p233 = scmp.eq.s32.totalorder %s27, 1
      %p234 = scmp.ne.s32.totalorder %s229, %s231
      %p235 = scmp.eq.s32.totalorder %s27, 0
      %p236 = por %p234, %p235
      %p237 = scmp.ne.s32.totalorder %s229, %s231
      %p238 = scmp.eq.s32.totalorder %s32, 1
      %p239 = por %p237, %p238
      %p240 = scmp.ne.s32.totalorder %s231, %s232
      %p241 = scmp.eq.s32.totalorder %s32, 0
      %p242 = por %p240, %p241
      %p243 = scmp.ne.s32.totalorder %s231, %s232
      %p244 = scmp.eq.s32.totalorder %s33, 1
      %p245 = por %p243, %p244
      %p247 = scmp.ne.s32.totalorder %s232, %s246
      %p248 = scmp.eq.s32.totalorder %s33, 0
      %p249 = por %p247, %p248
      %s251 = sadd.s32 %s250, 1
      %p254 = scmp.eq.s32.totalorder %s27, 1
      %p255 = scmp.ne.s32.totalorder %s250, %s252
      %p256 = scmp.eq.s32.totalorder %s27, 0
      %p257 = por %p255, %p256
      %p258 = scmp.ne.s32.totalorder %s250, %s252
      %p259 = scmp.eq.s32.totalorder %s32, 1
      %p260 = por %p258, %p259
      %p261 = scmp.ne.s32.totalorder %s252, %s253
      %p262 = scmp.eq.s32.totalorder %s32, 0
      %p263 = por %p261, %p262
      %p264 = scmp.ne.s32.totalorder %s252, %s253
      %p265 = scmp.eq.s32.totalorder %s33, 1
      %p266 = por %p264, %p265
      %p268 = scmp.ne.s32.totalorder %s253, %s267
      %p269 = scmp.eq.s32.totalorder %s33, 0
      %p270 = por %p268, %p269
      %s272 = sadd.s32 %s271, 1
      %p275 = scmp.eq.s32.totalorder %s27, 1
      %p276 = scmp.ne.s32.totalorder %s271, %s273
      %p277 = scmp.eq.s32.totalorder %s27, 0
      %p278 = por %p276, %p277
      %p279 = scmp.ne.s32.totalorder %s271, %s273
      %p280 = scmp.eq.s32.totalorder %s32, 1
      %p281 = por %p279, %p280
      %p282 = scmp.ne.s32.totalorder %s273, %s274
      %p283 = scmp.eq.s32.totalorder %s32, 0
      %p284 = por %p282, %p283
      %p285 = scmp.ne.s32.totalorder %s273, %s274
      %p286 = scmp.eq.s32.totalorder %s33, 1
      %p287 = por %p285, %p286
      %p289 = scmp.ne.s32.totalorder %s274, %s288
      %p290 = scmp.eq.s32.totalorder %s33, 0
      %p291 = por %p289, %p290
      %s293 = sadd.s32 %s292, 1
      %p296 = scmp.eq.s32.totalorder %s27, 1
      %p297 = scmp.ne.s32.totalorder %s292, %s294
      %p298 = scmp.eq.s32.totalorder %s27, 0
      %p299 = por %p297, %p298
      %p300 = scmp.ne.s32.totalorder %s292, %s294
      %p301 = scmp.eq.s32.totalorder %s32, 1
      %p302 = por %p300, %p301
      %p303 = scmp.ne.s32.totalorder %s294, %s295
      %p304 = scmp.eq.s32.totalorder %s32, 0
      %p305 = por %p303, %p304
      %p306 = scmp.ne.s32.totalorder %s294, %s295
      %p307 = scmp.eq.s32.totalorder %s33, 1
      %p308 = por %p306, %p307
      %p310 = scmp.ne.s32.totalorder %s295, %s309
      %p311 = scmp.eq.s32.totalorder %s33, 0
      %p312 = por %p310, %p311
      %s314 = sadd.s32 %s313, 1
      %p317 = scmp.eq.s32.totalorder %s27, 1
      %p318 = scmp.ne.s32.totalorder %s313, %s315
      %p319 = scmp.eq.s32.totalorder %s27, 0
      %p320 = por %p318, %p319
      %p321 = scmp.ne.s32.totalorder %s313, %s315
      %p322 = scmp.eq.s32.totalorder %s32, 1
      %p323 = por %p321, %p322
      %p324 = scmp.ne.s32.totalorder %s315, %s316
      %p325 = scmp.eq.s32.totalorder %s32, 0
      %p326 = por %p324, %p325
      %p327 = scmp.ne.s32.totalorder %s315, %s316
      %p328 = scmp.eq.s32.totalorder %s33, 1
      %p329 = por %p327, %p328
      %p331 = scmp.ne.s32.totalorder %s316, %s330
      %p332 = scmp.eq.s32.totalorder %s33, 0
      %p333 = por %p331, %p332
      %s335 = sadd.s32 %s334, 1
      %p338 = scmp.eq.s32.totalorder %s27, 1
      %p339 = scmp.ne.s32.totalorder %s334, %s336
      %p340 = scmp.eq.s32.totalorder %s27, 0
      %p341 = por %p339, %p340
      %p342 = scmp.ne.s32.totalorder %s334, %s336
      %p343 = scmp.eq.s32.totalorder %s32, 1
      %p344 = por %p342, %p343
      %p345 = scmp.ne.s32.totalorder %s336, %s337
      %p346 = scmp.eq.s32.totalorder %s32, 0
      %p347 = por %p345, %p346
      %p348 = scmp.ne.s32.totalorder %s336, %s337
      %p349 = scmp.eq.s32.totalorder %s33, 1
      %p350 = por %p348, %p349
      %p352 = scmp.ne.s32.totalorder %s337, %s351
      %p353 = scmp.eq.s32.totalorder %s33, 0
      %p354 = por %p352, %p353
      %s355 = ssub.s32 %s27, %s34
      %p356 = scmp.eq.s32.totalorder %s355, 0
      %s358 = sadd.s32 %s357, 1
      %s359 = scalar_select %p356, %s357, %s358
      %p362 = pneg %p356
      %p363 = scmp.eq.s32.totalorder %s27, 1
      %p364 = por %p362, %p363
      %p365 = scmp.ne.s32.totalorder %s357, %s360
      %p366 = scmp.eq.s32.totalorder %s27, 0
      %p367 = por %p365, %p366
      %p368 = scmp.ne.s32.totalorder %s357, %s360
      %p369 = scmp.eq.s32.totalorder %s32, 1
      %p370 = por %p368, %p369
      %p371 = scmp.ne.s32.totalorder %s360, %s361
      %p372 = scmp.eq.s32.totalorder %s32, 0
      %p373 = por %p371, %p372
      %p374 = scmp.ne.s32.totalorder %s360, %s361
      %p375 = scmp.eq.s32.totalorder %s33, 1
      %p376 = por %p374, %p375
      %p378 = scmp.ne.s32.totalorder %s361, %s377
      %p379 = scmp.eq.s32.totalorder %s33, 0
      %p380 = por %p378, %p379
      %p381 = scmp.le.s32.totalorder 1, %s27
      %p382 = scmp.lt.s32.totalorder %s27, 3
      %p383 = pnand %p381, %p382
      %p384 = pneg %p383
      // Predicated region
      $region9: #{lenet_forward.1} parent=5 // pred_check
        _
      $region10: #{lenet_forward.1} parent=5 // pred_check_branch
        %386 = sbr.rel (%p383) target = $region12
      $region11: #{lenet_forward.1} parent=5 // pred_region
        %s387 = ssub.s32 %s27, 1
        // Predicated region
        $region13: #{lenet_forward.1} parent=11 // pred_check
          %p388 = pneg %p74
        $region14: #{lenet_forward.1} parent=11 // pred_check_branch
          %390 = sbr.rel (%p388) target = $region16
        $region15: #{lenet_forward.1} parent=11 // pred_region
          %s392 = ssub.s32 2560, 2560
          %393 = vsyncadd [#allocation3], %s392
          %s394 = sshll.u32 [#allocation2], 4
          %s395 = int_to_ptr.vmem [resolvable:$true] %s394
          %400 = dma.hbm_to_vmem [thread:$0]  %s1, 2560, %s395, [#allocation3], 128, 128, 8
        $region16: #{lenet_forward.1} parent=11 // pred_fallthru
          _
        // Predicated region
        $region17: #{lenet_forward.1} parent=11 // pred_check
          %p401 = pneg %p95
        $region18: #{lenet_forward.1} parent=11 // pred_check_branch
          %403 = sbr.rel (%p401) target = $region20
        $region19: #{lenet_forward.1} parent=11 // pred_region
          _
        $region20: #{lenet_forward.1} parent=11 // pred_fallthru
          _
        // Predicated region
        $region21: #{lenet_forward.1} parent=11 // pred_check
          %p404 = pneg %p116
        $region22: #{lenet_forward.1} parent=11 // pred_check_branch
          %406 = sbr.rel (%p404) target = $region24
        $region23: #{lenet_forward.1} parent=11 // pred_region
          _
        $region24: #{lenet_forward.1} parent=11 // pred_fallthru
          _
        // Predicated region
        $region25: #{lenet_forward.1} parent=11 // pred_check
          %p407 = pneg %p137
        $region26: #{lenet_forward.1} parent=11 // pred_check_branch
          %409 = sbr.rel (%p407) target = $region28
        $region27: #{lenet_forward.1} parent=11 // pred_region
          _
        $region28: #{lenet_forward.1} parent=11 // pred_fallthru
          _
        // Predicated region
        $region29: #{lenet_forward.1} parent=11 // pred_check
          %p410 = pneg %p158
        $region30: #{lenet_forward.1} parent=11 // pred_check_branch
          %412 = sbr.rel (%p410) target = $region32
        $region31: #{lenet_forward.1} parent=11 // pred_region
          %s414 = ssub.s32 10240, 10240
          %415 = vsyncadd [#allocation6], %s414
          %s416 = sshll.u32 [#allocation5], 4
          %s417 = int_to_ptr.vmem [resolvable:$true] %s416
          %422 = dma.hbm_to_vmem [thread:$0]  %s5, 10240, %s417, [#allocation6], 128, 128, 8
        $region32: #{lenet_forward.1} parent=11 // pred_fallthru
          _
        // Predicated region
        $region33: #{lenet_forward.1} parent=11 // pred_check
          %p423 = pneg %p179
        $region34: #{lenet_forward.1} parent=11 // pred_check_branch
          %425 = sbr.rel (%p423) target = $region36
        $region35: #{lenet_forward.1} parent=11 // pred_region
          _
        $region36: #{lenet_forward.1} parent=11 // pred_fallthru
          _
        // Predicated region
        $region37: #{lenet_forward.1} parent=11 // pred_check
          %p426 = pneg %p200
        $region38: #{lenet_forward.1} parent=11 // pred_check_branch
          %428 = sbr.rel (%p426) target = $region40
        $region39: #{lenet_forward.1} parent=11 // pred_region
          _
        $region40: #{lenet_forward.1} parent=11 // pred_fallthru
          _
        // Predicated region
        $region41: #{lenet_forward.1} parent=11 // pred_check
          %p429 = pneg %p221
        $region42: #{lenet_forward.1} parent=11 // pred_check_branch
          %431 = sbr.rel (%p429) target = $region44
        $region43: #{lenet_forward.1} parent=11 // pred_region
          _
        $region44: #{lenet_forward.1} parent=11 // pred_fallthru
          _
        // Predicated region
        $region45: #{lenet_forward.1} parent=11 // pred_check
          %p432 = pneg %p242
        $region46: #{lenet_forward.1} parent=11 // pred_check_branch
          %434 = sbr.rel (%p432) target = $region48
        $region47: #{lenet_forward.1} parent=11 // pred_region
          _
        $region48: #{lenet_forward.1} parent=11 // pred_fallthru
          _
        // Predicated region
        $region49: #{lenet_forward.1} parent=11 // pred_check
          %p435 = pneg %p263
        $region50: #{lenet_forward.1} parent=11 // pred_check_branch
          %437 = sbr.rel (%p435) target = $region52
        $region51: #{lenet_forward.1} parent=11 // pred_region
          _
        $region52: #{lenet_forward.1} parent=11 // pred_fallthru
          _
        // Predicated region
        $region53: #{lenet_forward.1} parent=11 // pred_check
          %p438 = pneg %p284
        $region54: #{lenet_forward.1} parent=11 // pred_check_branch
          %440 = sbr.rel (%p438) target = $region56
        $region55: #{lenet_forward.1} parent=11 // pred_region
          %s442 = ssub.s32 1024, 1024
          %443 = vsyncadd [#allocation6], %s442
          %s444 = sshll.u32 [#allocation7], 4
          %s445 = int_to_ptr.vmem [resolvable:$true] %s444
          %450 = dma.hbm_to_vmem [thread:$0]  %s11, 1024, %s445, [#allocation6], 64, 64, 4
        $region56: #{lenet_forward.1} parent=11 // pred_fallthru
          _
        // Predicated region
        $region57: #{lenet_forward.1} parent=11 // pred_check
          %p451 = pneg %p305
        $region58: #{lenet_forward.1} parent=11 // pred_check_branch
          %453 = sbr.rel (%p451) target = $region60
        $region59: #{lenet_forward.1} parent=11 // pred_region
          _
        $region60: #{lenet_forward.1} parent=11 // pred_fallthru
          _
        // Predicated region
        $region61: #{lenet_forward.1} parent=11 // pred_check
          %p454 = pneg %p326
        $region62: #{lenet_forward.1} parent=11 // pred_check_branch
          %456 = sbr.rel (%p454) target = $region64
        $region63: #{lenet_forward.1} parent=11 // pred_region
          %s458 = ssub.s32 1024, 1024
          %459 = vsyncadd [#allocation9], %s458
          %s460 = sshll.u32 [#allocation8], 4
          %s461 = int_to_ptr.vmem [resolvable:$true] %s460
          %466 = dma.hbm_to_vmem [thread:$0]  %s13, 1024, %s461, [#allocation9], 64, 64, 4
        $region64: #{lenet_forward.1} parent=11 // pred_fallthru
          _
        // Predicated region
        $region65: #{lenet_forward.1} parent=11 // pred_check
          %p467 = pneg %p347
        $region66: #{lenet_forward.1} parent=11 // pred_check_branch
          %469 = sbr.rel (%p467) target = $region68
        $region67: #{lenet_forward.1} parent=11 // pred_region
          _
        $region68: #{lenet_forward.1} parent=11 // pred_fallthru
          _
      $region12: #{lenet_forward.1} parent=5 // pred_fallthru
        _
      %p470 = scmp.lt.s32.totalorder %s27, 2
      // Predicated region
      $region69: #{lenet_forward.1} parent=5 // pred_check
        %p471 = pneg %p470
      $region70: #{lenet_forward.1} parent=5 // pred_check_branch
        %473 = sbr.rel (%p471) target = $region72
      $region71: #{lenet_forward.1} parent=5 // pred_region
        // Predicated region
        $region73: #{lenet_forward.1} parent=71 // pred_check
          %p474 = pneg %p47
        $region74: #{lenet_forward.1} parent=71 // pred_check_branch
          %476 = sbr.rel (%p474) target = $region76
        $region75: #{lenet_forward.1} parent=71 // pred_region
          %p477 = scmp.lt.s32.totalorder %s27, 1
          %s478 = scalar_select %p477, %s27, 1
          %s479 = smul.addr %s478, 4
          %s480 = smul.addr %s479, 8
          %s481 = scalar_lea.vmem %s0, %s480
        $region76: #{lenet_forward.1} parent=71 // pred_fallthru
          _
      $region72: #{lenet_forward.1} parent=5 // pred_fallthru
        _
      %p482 = scmp.le.s32.totalorder 1, %s27
      %p483 = scmp.lt.s32.totalorder %s27, 3
      %p484 = pnand %p482, %p483
      %p485 = pneg %p484
      // Predicated region
      $region77: #{lenet_forward.1} parent=5 // pred_check
        _
      $region78: #{lenet_forward.1} parent=5 // pred_check_branch
        %487 = sbr.rel (%p484) target = $region80
      $region79: #{lenet_forward.1} parent=5 // pred_region
        %s488 = ssub.s32 %s27, 1
        // Predicated region
        $region81: #{lenet_forward.1} parent=79 // pred_check
          %p489 = pneg %p74
        $region82: #{lenet_forward.1} parent=79 // pred_check_branch
          %491 = sbr.rel (%p489) target = $region84
        $region83: #{lenet_forward.1} parent=79 // pred_region
          %492 = dma.done [#allocation3], 2560
        $region84: #{lenet_forward.1} parent=79 // pred_fallthru
          _
        // Predicated region
        $region85: #{lenet_forward.1} parent=79 // pred_check
          %p493 = pneg %p158
        $region86: #{lenet_forward.1} parent=79 // pred_check_branch
          %495 = sbr.rel (%p493) target = $region88
        $region87: #{lenet_forward.1} parent=79 // pred_region
          %496 = dma.done [#allocation6], 10240
        $region88: #{lenet_forward.1} parent=79 // pred_fallthru
          _
        // Predicated region
        $region89: #{lenet_forward.1} parent=79 // pred_check
          %p497 = pneg %p284
        $region90: #{lenet_forward.1} parent=79 // pred_check_branch
          %499 = sbr.rel (%p497) target = $region92
        $region91: #{lenet_forward.1} parent=79 // pred_region
          %500 = dma.done [#allocation6], 1024
        $region92: #{lenet_forward.1} parent=79 // pred_fallthru
          _
        // Predicated region
        $region93: #{lenet_forward.1} parent=79 // pred_check
          %p501 = pneg %p326
        $region94: #{lenet_forward.1} parent=79 // pred_check_branch
          %503 = sbr.rel (%p501) target = $region96
        $region95: #{lenet_forward.1} parent=79 // pred_region
          %504 = dma.done [#allocation9], 1024
        $region96: #{lenet_forward.1} parent=79 // pred_fallthru
          _
        %p505 = scmp.lt.s32.totalorder %s32, 1
        %s506 = scalar_select %p505, %s32, 1
        %s507 = smul.addr %s506, 4
        %s508 = smul.addr %s507, 8
        %s509 = scalar_lea.vmem %s0, %s508
        %p510 = pneg %p53
        %p511 = pneg %p50
        %p512 = pneg %p74
        %p513 = pneg %p71
        %p514 = pneg %p95
        %p515 = pneg %p92
        %p516 = pneg %p116
        %p517 = pneg %p113
        %p518 = pneg %p137
        %p519 = pneg %p134
        %p520 = pneg %p158
        %p521 = pneg %p155
        %p522 = pneg %p179
        %p523 = pneg %p176
        %p524 = pneg %p200
        %p525 = pneg %p197
        %p526 = pneg %p221
        %p527 = pneg %p218
        %p528 = pneg %p242
        %p529 = pneg %p239
        %p530 = pneg %p263
        %p531 = pneg %p260
        %p532 = pneg %p284
        %p533 = pneg %p281
        %p534 = pneg %p305
        %p535 = pneg %p302
        %p536 = pneg %p326
        %p537 = pneg %p323
        %p538 = pneg %p347
        %p539 = pneg %p344
        %p540 = pneg %p373
        %p541 = pneg %p370
        %s542 = sand.u32 %s360, 1
        %s543 = scalar_lea.sflag [#allocation4], %s542
        %s544 = sand.u32 %s360, 1
        %s545 = scalar_lea.vmem [#allocation10], %s544
        %p546 = scmp.lt.s32.totalorder %s32, 1
        %s547 = scalar_select %p546, %s32, 1
        %s548 = smul.addr %s547, 4
        %s549 = smul.addr %s548, 8
        %s550 = scalar_lea.vmem %s0, %s549
        %v552 = vld [vmem:[%s550] sm:$0xff]
        %v553 = vld [vmem:[%s550 + $0x8] sm:$0xff]
        %v554 = vld [vmem:[%s550 + $0x10] sm:$0xff]
        %v555 = vld [vmem:[%s550 + $0x18] sm:$0xff]
        %v556 = vpack.c.bf16 %v553, %v552
        %v557 = vpack.c.bf16 %v555, %v554
        %v558 = vld [vmem:[#allocation2] sm:$0xff]
        %v559 = vld [vmem:[#allocation2 + $0x8] sm:$0xff]
        %v560 = vld [vmem:[#allocation2 + $0x10] sm:$0xff]
        %v561 = vld [vmem:[#allocation2 + $0x18] sm:$0xff]
        %s562 = scalar_lea.vmem [#allocation2], 32
        %v563 = vld [vmem:[%s562] sm:$0xff]
        %v564 = vld [vmem:[%s562 + $0x8] sm:$0xff]
        %v565 = vld [vmem:[%s562 + $0x10] sm:$0xff]
        %v566 = vld [vmem:[%s562 + $0x18] sm:$0xff]
        %vm567 = vsmask.f32 7424
        %v569 = vshrl.u32 %v556, 16
        %v571 = vshll.u32 %v556, 16
        %v573 = vrot.slane %v571, 1
        %v574 = vor.u32 %v569, %v573
        %v576 = vshll.u32 %v557, 16
        %v578 = vrot.slane %v576, 1
        %v579 = vsel %vm567, %v574, %v578
        %v580 = vshrl.u32 %v557, 16
        %v582 = vor.u32 %v580, %v578
        %v587 = vunpack.c.l.b16 %v563
        %v588 = vunpack.c.h.b16 %v563
        %v589 = vunpack.c.l.b16 %v564
        %v590 = vunpack.c.h.b16 %v564
        %v591 = vunpack.c.l.b16 %v565
        %v592 = vunpack.c.h.b16 %v565
        %v593 = vunpack.c.l.b16 %v566
        %v594 = vunpack.c.h.b16 %v566
        %v595 = vpack.c.b16 %v589, %v587
        %v596 = vpack.c.b16 %v590, %v588
        %v597 = vpack.c.b16 %v593, %v591
        %v598 = vpack.c.b16 %v594, %v592
        %vm603 = vcmask 261120
        %v605 = vsel %vm603, %v579, 0
        %v608 = vsel %vm603, %v582, 0
        %610 = vmatprep.subr.bf16.mxu0 0
        %611 = vmatpush1.bf16.msra.mxu0 0
        %612 = vmatprep.subr.bf16.mxu0 0
        %613 = vmatpush1.bf16.msra.mxu0 0
        %614 = vmatprep.subr.bf16.mxu0 0
        %615 = vmatpush1.bf16.msra.mxu0 0
        %616 = vmatprep.subr.bf16.mxu0 0
        %617 = vmatpush1.bf16.msra.mxu0 0
        %618 = vmatprep.subr.bf16.mxu0 0
        %619 = vmatpush1.bf16.msra.mxu0 0
        %620 = vmatprep.subr.bf16.mxu0 0
        %621 = vmatpush1.bf16.msra.mxu0 0
        %622 = vmatprep.subr.bf16.mxu0 %v598
        %623 = vmatpush1.bf16.msra.mxu0 %v597
        %624 = vmatprep.subr.bf16.mxu0 %v596
        %625 = vmatpush1.bf16.msra.mxu0 %v595
        %626 = vmatprep.subr.bf16.mxu0 0
        %627 = vmatpush2.bf16.msra.mxu0 0
        %628 = vmatprep.subr.bf16.mxu0 0
        %629 = vmatpush2.bf16.msra.mxu0 0
        %630 = vmatprep.subr.bf16.mxu0 0
        %631 = vmatpush2.bf16.msra.mxu0 0
        %632 = vmatprep.subr.bf16.mxu0 0
        %633 = vmatpush2.bf16.msra.mxu0 0
        %634 = vmatprep.subr.bf16.mxu0 0
        %635 = vmatpush2.bf16.msra.mxu0 0
        %636 = vmatprep.subr.bf16.mxu0 0
        %637 = vmatpush2.bf16.msra.mxu0 0
        %638 = vmatprep.subr.bf16.mxu0 0
        %639 = vmatpush2.bf16.msra.mxu0 0
        %640 = vmatprep.subr.bf16.mxu0 0
        %641 = vmatpush2.bf16.msra.mxu0 0
        %642 = vmatprep.mubr.bf16.mxu0 0
        %643 = vmatmul.mubr.bf16.gmra.mxu0 %v605
        %v644 = vpop.f32.mrf.mxu0
        %v645 = vadd.f32 0.0, %v644
        %v646 = vpop.f32.mrf.mxu0
        %v647 = vadd.f32 0.0, %v646
        %v648 = vpop.f32.mrf.mxu0
        %v649 = vadd.f32 0.0, %v648
        %v650 = vpop.f32.mrf.mxu0
        %v651 = vadd.f32 0.0, %v650
        %652 = vmatprep.mubr.bf16.mxu0 0
        %653 = vmatmul.mubr.bf16.gmra.mxu0 %v608
        %v654 = vpop.f32.mrf.mxu0
        %v655 = vadd.f32 0.0, %v654
        %v656 = vpop.f32.mrf.mxu0
        %v657 = vadd.f32 0.0, %v656
        %v658 = vpop.f32.mrf.mxu0
        %v659 = vadd.f32 0.0, %v658
        %v660 = vpop.f32.mrf.mxu0
        %v661 = vadd.f32 0.0, %v660
        %662 = vdwg.mxu0
        %v667 = vunpack.c.l.b16 %v558
        %v668 = vunpack.c.h.b16 %v558
        %v669 = vunpack.c.l.b16 %v559
        %v670 = vunpack.c.h.b16 %v559
        %v671 = vunpack.c.l.b16 %v560
        %v672 = vunpack.c.h.b16 %v560
        %v673 = vunpack.c.l.b16 %v561
        %v674 = vunpack.c.h.b16 %v561
        %v675 = vpack.c.b16 %v669, %v667
        %v676 = vpack.c.b16 %v670, %v668
        %v677 = vpack.c.b16 %v673, %v671
        %v678 = vpack.c.b16 %v674, %v672
        %v683 = vsel %vm603, %v556, 0
        %v685 = vsel %vm603, %v557, 0
        %687 = vmatprep.subr.bf16.mxu0 0
        %688 = vmatpush1.bf16.msra.mxu0 0
        %689 = vmatprep.subr.bf16.mxu0 0
        %690 = vmatpush1.bf16.msra.mxu0 0
        %691 = vmatprep.subr.bf16.mxu0 0
        %692 = vmatpush1.bf16.msra.mxu0 0
        %693 = vmatprep.subr.bf16.mxu0 0
        %694 = vmatpush1.bf16.msra.mxu0 0
        %695 = vmatprep.subr.bf16.mxu0 0
        %696 = vmatpush1.bf16.msra.mxu0 0
        %697 = vmatprep.subr.bf16.mxu0 0
        %698 = vmatpush1.bf16.msra.mxu0 0
        %699 = vmatprep.subr.bf16.mxu0 %v678
        %700 = vmatpush1.bf16.msra.mxu0 %v677
        %701 = vmatprep.subr.bf16.mxu0 %v676
        %702 = vmatpush1.bf16.msra.mxu0 %v675
        %703 = vmatprep.subr.bf16.mxu0 0
        %704 = vmatpush2.bf16.msra.mxu0 0
        %705 = vmatprep.subr.bf16.mxu0 0
        %706 = vmatpush2.bf16.msra.mxu0 0
        %707 = vmatprep.subr.bf16.mxu0 0
        %708 = vmatpush2.bf16.msra.mxu0 0
        %709 = vmatprep.subr.bf16.mxu0 0
        %710 = vmatpush2.bf16.msra.mxu0 0
        %711 = vmatprep.subr.bf16.mxu0 0
        %712 = vmatpush2.bf16.msra.mxu0 0
        %713 = vmatprep.subr.bf16.mxu0 0
        %714 = vmatpush2.bf16.msra.mxu0 0
        %715 = vmatprep.subr.bf16.mxu0 0
        %716 = vmatpush2.bf16.msra.mxu0 0
        %717 = vmatprep.subr.bf16.mxu0 0
        %718 = vmatpush2.bf16.msra.mxu0 0
        %719 = vmatprep.mubr.bf16.mxu0 0
        %720 = vmatmul.mubr.bf16.gmra.mxu0 %v683
        %v721 = vpop.f32.mrf.mxu0
        %v722 = vadd.f32 %v645, %v721
        %v723 = vpop.f32.mrf.mxu0
        %v724 = vadd.f32 %v647, %v723
        %v725 = vpop.f32.mrf.mxu0
        %v726 = vadd.f32 %v649, %v725
        %v727 = vpop.f32.mrf.mxu0
        %v728 = vadd.f32 %v651, %v727
        %729 = vmatprep.mubr.bf16.mxu0 0
        %730 = vmatmul.mubr.bf16.gmra.mxu0 %v685
        %v731 = vpop.f32.mrf.mxu0
        %v732 = vadd.f32 %v655, %v731
        %v733 = vpop.f32.mrf.mxu0
        %v734 = vadd.f32 %v657, %v733
        %v735 = vpop.f32.mrf.mxu0
        %v736 = vadd.f32 %v659, %v735
        %v737 = vpop.f32.mrf.mxu0
        %v738 = vadd.f32 %v661, %v737
        %739 = vdwg.mxu0
        %s740 = scalar_lea.vmem [#allocation2], 64
        %v741 = vld [vmem:[%s740] sm:$0xff]
        %v742 = vld [vmem:[%s740 + $0x8] sm:$0xff]
        %v743 = vld [vmem:[%s740 + $0x10] sm:$0xff]
        %v744 = vld [vmem:[%s740 + $0x18] sm:$0xff]
        %vm747 = vcmask 1046528
        %v748 = vrot.slane %v556, 1
        %v749 = vrot.slane %v557, 1
        %v750 = vsel %vm747, %v748, %v749
        %v755 = vunpack.c.l.b16 %v741
        %v756 = vunpack.c.h.b16 %v741
        %v757 = vunpack.c.l.b16 %v742
        %v758 = vunpack.c.h.b16 %v742
        %v759 = vunpack.c.l.b16 %v743
        %v760 = vunpack.c.h.b16 %v743
        %v761 = vunpack.c.l.b16 %v744
        %v762 = vunpack.c.h.b16 %v744
        %v763 = vpack.c.b16 %v757, %v755
        %v764 = vpack.c.b16 %v758, %v756
        %v765 = vpack.c.b16 %v761, %v759
        %v766 = vpack.c.b16 %v762, %v760
        %v772 = vsel %vm603, %v750, 0
        %v775 = vsel %vm603, %v749, 0
        %777 = vmatprep.subr.bf16.mxu0 0
        %778 = vmatpush1.bf16.msra.mxu0 0
        %779 = vmatprep.subr.bf16.mxu0 0
        %780 = vmatpush1.bf16.msra.mxu0 0
        %781 = vmatprep.subr.bf16.mxu0 0
        %782 = vmatpush1.bf16.msra.mxu0 0
        %783 = vmatprep.subr.bf16.mxu0 0
        %784 = vmatpush1.bf16.msra.mxu0 0
        %785 = vmatprep.subr.bf16.mxu0 0
        %786 = vmatpush1.bf16.msra.mxu0 0
        %787 = vmatprep.subr.bf16.mxu0 0
        %788 = vmatpush1.bf16.msra.mxu0 0
        %789 = vmatprep.subr.bf16.mxu0 %v766
        %790 = vmatpush1.bf16.msra.mxu0 %v765
        %791 = vmatprep.subr.bf16.mxu0 %v764
        %792 = vmatpush1.bf16.msra.mxu0 %v763
        %793 = vmatprep.subr.bf16.mxu0 0
        %794 = vmatpush2.bf16.msra.mxu0 0
        %795 = vmatprep.subr.bf16.mxu0 0
        %796 = vmatpush2.bf16.msra.mxu0 0
        %797 = vmatprep.subr.bf16.mxu0 0
        %798 = vmatpush2.bf16.msra.mxu0 0
        %799 = vmatprep.subr.bf16.mxu0 0
        %800 = vmatpush2.bf16.msra.mxu0 0
        %801 = vmatprep.subr.bf16.mxu0 0
        %802 = vmatpush2.bf16.msra.mxu0 0
        %803 = vmatprep.subr.bf16.mxu0 0
        %804 = vmatpush2.bf16.msra.mxu0 0
        %805 = vmatprep.subr.bf16.mxu0 0
        %806 = vmatpush2.bf16.msra.mxu0 0
        %807 = vmatprep.subr.bf16.mxu0 0
        %808 = vmatpush2.bf16.msra.mxu0 0
        %809 = vmatprep.mubr.bf16.mxu0 0
        %810 = vmatmul.mubr.bf16.gmra.mxu0 %v772
        %v811 = vpop.f32.mrf.mxu0
        %v812 = vadd.f32 0.0, %v811
        %v813 = vpop.f32.mrf.mxu0
        %v814 = vadd.f32 0.0, %v813
        %v815 = vpop.f32.mrf.mxu0
        %v816 = vadd.f32 0.0, %v815
        %v817 = vpop.f32.mrf.mxu0
        %v818 = vadd.f32 0.0, %v817
        %819 = vmatprep.mubr.bf16.mxu0 0
        %820 = vmatmul.mubr.bf16.gmra.mxu0 %v775
        %v821 = vpop.f32.mrf.mxu0
        %v822 = vadd.f32 0.0, %v821
        %v823 = vpop.f32.mrf.mxu0
        %v824 = vadd.f32 0.0, %v823
        %v825 = vpop.f32.mrf.mxu0
        %v826 = vadd.f32 0.0, %v825
        %v827 = vpop.f32.mrf.mxu0
        %v828 = vadd.f32 0.0, %v827
        %829 = vdwg.mxu0
        %v830 = vadd.f32 %v722, %v812
        %v831 = vadd.f32 %v724, %v814
        %v832 = vadd.f32 %v726, %v816
        %v833 = vadd.f32 %v728, %v818
        %v834 = vadd.f32 %v732, %v822
        %v835 = vadd.f32 %v734, %v824
        %v836 = vadd.f32 %v736, %v826
        %v837 = vadd.f32 %v738, %v828
        %s838 = scalar_lea.vmem [#allocation2], 96
        %v839 = vld [vmem:[%s838] sm:$0xff]
        %v840 = vld [vmem:[%s838 + $0x8] sm:$0xff]
        %v841 = vld [vmem:[%s838 + $0x10] sm:$0xff]
        %v842 = vld [vmem:[%s838 + $0x18] sm:$0xff]
        %vm843 = vsmask.f32 6400
        %v844 = vrot.slane %v569, 1
        %v845 = vrot.slane %v571, 2
        %v846 = vor.u32 %v844, %v845
        %v847 = vrot.slane %v580, 1
        %v848 = vrot.slane %v576, 2
        %v849 = vor.u32 %v847, %v848
        %v850 = vsel %vm843, %v846, %v849
        %v855 = vunpack.c.l.b16 %v839
        %v856 = vunpack.c.h.b16 %v839
        %v857 = vunpack.c.l.b16 %v840
        %v858 = vunpack.c.h.b16 %v840
        %v859 = vunpack.c.l.b16 %v841
        %v860 = vunpack.c.h.b16 %v841
        %v861 = vunpack.c.l.b16 %v842
        %v862 = vunpack.c.h.b16 %v842
        %v863 = vpack.c.b16 %v857, %v855
        %v864 = vpack.c.b16 %v858, %v856
        %v865 = vpack.c.b16 %v861, %v859
        %v866 = vpack.c.b16 %v862, %v860
        %v872 = vsel %vm603, %v850, 0
        %v875 = vsel %vm603, %v849, 0
        %877 = vmatprep.subr.bf16.mxu0 0
        %878 = vmatpush1.bf16.msra.mxu0 0
        %879 = vmatprep.subr.bf16.mxu0 0
        %880 = vmatpush1.bf16.msra.mxu0 0
        %881 = vmatprep.subr.bf16.mxu0 0
        %882 = vmatpush1.bf16.msra.mxu0 0
        %883 = vmatprep.subr.bf16.mxu0 0
        %884 = vmatpush1.bf16.msra.mxu0 0
        %885 = vmatprep.subr.bf16.mxu0 0
        %886 = vmatpush1.bf16.msra.mxu0 0
        %887 = vmatprep.subr.bf16.mxu0 0
        %888 = vmatpush1.bf16.msra.mxu0 0
        %889 = vmatprep.subr.bf16.mxu0 %v866
        %890 = vmatpush1.bf16.msra.mxu0 %v865
        %891 = vmatprep.subr.bf16.mxu0 %v864
        %892 = vmatpush1.bf16.msra.mxu0 %v863
        %893 = vmatprep.subr.bf16.mxu0 0
        %894 = vmatpush2.bf16.msra.mxu0 0
        %895 = vmatprep.subr.bf16.mxu0 0
        %896 = vmatpush2.bf16.msra.mxu0 0
        %897 = vmatprep.subr.bf16.mxu0 0
        %898 = vmatpush2.bf16.msra.mxu0 0
        %899 = vmatprep.subr.bf16.mxu0 0
        %900 = vmatpush2.bf16.msra.mxu0 0
        %901 = vmatprep.subr.bf16.mxu0 0
        %902 = vmatpush2.bf16.msra.mxu0 0
        %903 = vmatprep.subr.bf16.mxu0 0
        %904 = vmatpush2.bf16.msra.mxu0 0
        %905 = vmatprep.subr.bf16.mxu0 0
        %906 = vmatpush2.bf16.msra.mxu0 0
        %907 = vmatprep.subr.bf16.mxu0 0
        %908 = vmatpush2.bf16.msra.mxu0 0
        %909 = vmatprep.mubr.bf16.mxu0 0
        %910 = vmatmul.mubr.bf16.gmra.mxu0 %v872
        %v911 = vpop.f32.mrf.mxu0
        %v912 = vadd.f32 0.0, %v911
        %v913 = vpop.f32.mrf.mxu0
        %v914 = vadd.f32 0.0, %v913
        %v915 = vpop.f32.mrf.mxu0
        %v916 = vadd.f32 0.0, %v915
        %v917 = vpop.f32.mrf.mxu0
        %v918 = vadd.f32 0.0, %v917
        %919 = vmatprep.mubr.bf16.mxu0 0
        %920 = vmatmul.mubr.bf16.gmra.mxu0 %v875
        %v921 = vpop.f32.mrf.mxu0
        %v922 = vadd.f32 0.0, %v921
        %v923 = vpop.f32.mrf.mxu0
        %v924 = vadd.f32 0.0, %v923
        %v925 = vpop.f32.mrf.mxu0
        %v926 = vadd.f32 0.0, %v925
        %v927 = vpop.f32.mrf.mxu0
        %v928 = vadd.f32 0.0, %v927
        %929 = vdwg.mxu0
        %v930 = vadd.f32 %v830, %v912
        %v931 = vadd.f32 %v831, %v914
        %v932 = vadd.f32 %v832, %v916
        %v933 = vadd.f32 %v833, %v918
        %v934 = vadd.f32 %v834, %v922
        %v935 = vadd.f32 %v835, %v924
        %v936 = vadd.f32 %v836, %v926
        %v937 = vadd.f32 %v837, %v928
        %s938 = scalar_lea.vmem [#allocation2], 128
        %v939 = vld [vmem:[%s938] sm:$0xff]
        %v940 = vld [vmem:[%s938 + $0x8] sm:$0xff]
        %v941 = vld [vmem:[%s938 + $0x10] sm:$0xff]
        %v942 = vld [vmem:[%s938 + $0x18] sm:$0xff]
        %vm943 = vcmask 1045504
        %v944 = vrot.slane %v556, 2
        %v945 = vrot.slane %v557, 2
        %v946 = vsel %vm943, %v944, %v945
        %v951 = vunpack.c.l.b16 %v939
        %v952 = vunpack.c.h.b16 %v939
        %v953 = vunpack.c.l.b16 %v940
        %v954 = vunpack.c.h.b16 %v940
        %v955 = vunpack.c.l.b16 %v941
        %v956 = vunpack.c.h.b16 %v941
        %v957 = vunpack.c.l.b16 %v942
        %v958 = vunpack.c.h.b16 %v942
        %v959 = vpack.c.b16 %v953, %v951
        %v960 = vpack.c.b16 %v954, %v952
        %v961 = vpack.c.b16 %v957, %v955
        %v962 = vpack.c.b16 %v958, %v956
        %v968 = vsel %vm603, %v946, 0
        %v971 = vsel %vm603, %v945, 0
        %973 = vmatprep.subr.bf16.mxu0 0
        %974 = vmatpush1.bf16.msra.mxu0 0
        %975 = vmatprep.subr.bf16.mxu0 0
        %976 = vmatpush1.bf16.msra.mxu0 0
        %977 = vmatprep.subr.bf16.mxu0 0
        %978 = vmatpush1.bf16.msra.mxu0 0
        %979 = vmatprep.subr.bf16.mxu0 0
        %980 = vmatpush1.bf16.msra.mxu0 0
        %981 = vmatprep.subr.bf16.mxu0 0
        %982 = vmatpush1.bf16.msra.mxu0 0
        %983 = vmatprep.subr.bf16.mxu0 0
        %984 = vmatpush1.bf16.msra.mxu0 0
        %985 = vmatprep.subr.bf16.mxu0 %v962
        %986 = vmatpush1.bf16.msra.mxu0 %v961
        %987 = vmatprep.subr.bf16.mxu0 %v960
        %988 = vmatpush1.bf16.msra.mxu0 %v959
        %989 = vmatprep.subr.bf16.mxu0 0
        %990 = vmatpush2.bf16.msra.mxu0 0
        %991 = vmatprep.subr.bf16.mxu0 0
        %992 = vmatpush2.bf16.msra.mxu0 0
        %993 = vmatprep.subr.bf16.mxu0 0
        %994 = vmatpush2.bf16.msra.mxu0 0
        %995 = vmatprep.subr.bf16.mxu0 0
        %996 = vmatpush2.bf16.msra.mxu0 0
        %997 = vmatprep.subr.bf16.mxu0 0
        %998 = vmatpush2.bf16.msra.mxu0 0
        %999 = vmatprep.subr.bf16.mxu0 0
        %1000 = vmatpush2.bf16.msra.mxu0 0
        %1001 = vmatprep.subr.bf16.mxu0 0
        %1002 = vmatpush2.bf16.msra.mxu0 0
        %1003 = vmatprep.subr.bf16.mxu0 0
        %1004 = vmatpush2.bf16.msra.mxu0 0
        %1005 = vmatprep.mubr.bf16.mxu0 0
        %1006 = vmatmul.mubr.bf16.gmra.mxu0 %v968
        %v1007 = vpop.f32.mrf.mxu0
        %v1008 = vadd.f32 0.0, %v1007
        %v1009 = vpop.f32.mrf.mxu0
        %v1010 = vadd.f32 0.0, %v1009
        %v1011 = vpop.f32.mrf.mxu0
        %v1012 = vadd.f32 0.0, %v1011
        %v1013 = vpop.f32.mrf.mxu0
        %v1014 = vadd.f32 0.0, %v1013
        %1015 = vmatprep.mubr.bf16.mxu0 0
        %1016 = vmatmul.mubr.bf16.gmra.mxu0 %v971
        %v1017 = vpop.f32.mrf.mxu0
        %v1018 = vadd.f32 0.0, %v1017
        %v1019 = vpop.f32.mrf.mxu0
        %v1020 = vadd.f32 0.0, %v1019
        %v1021 = vpop.f32.mrf.mxu0
        %v1022 = vadd.f32 0.0, %v1021
        %v1023 = vpop.f32.mrf.mxu0
        %v1024 = vadd.f32 0.0, %v1023
        %1025 = vdwg.mxu0
        %v1026 = vadd.f32 %v930, %v1008
        %v1027 = vadd.f32 %v931, %v1010
        %v1028 = vadd.f32 %v932, %v1012
        %v1029 = vadd.f32 %v933, %v1014
        %v1030 = vadd.f32 %v934, %v1018
        %v1031 = vadd.f32 %v935, %v1020
        %v1032 = vadd.f32 %v936, %v1022
        %v1033 = vadd.f32 %v937, %v1024
        %v1034 = vld [vmem:[%s2] sm:$0x3]
        %v1036 = vlaneseq
        %v1037 = vshrl.u32 %v1036, 7
        %v1038 = vsub.s32 0, %v1037
        %v1039 = vrot.slane %v1034, %v1038
        %v1040 = vlaneseq
        %v1041 = vshrl.u32 %v1040, 7
        %v1042 = vsub.s32 1, %v1041
        %v1043 = vrot.slane %v1034, %v1042
        %v1046 = vadd.f32 %v1026, %v1039
        %v1047 = vadd.f32 %v1027, %v1043
        %v1048 = vadd.f32 %v1028, %v1039
        %v1049 = vadd.f32 %v1029, %v1043
        %v1050 = vadd.f32 %v1030, %v1039
        %v1051 = vadd.f32 %v1031, %v1043
        %v1052 = vadd.f32 %v1032, %v1039
        %v1053 = vadd.f32 %v1033, %v1043
        %v1054 = vmax.f32 %v1046, 0.0
        %v1055 = vmax.f32 %v1047, 0.0
        %v1056 = vmax.f32 %v1048, 0.0
        %v1057 = vmax.f32 %v1049, 0.0
        %v1058 = vmax.f32 %v1050, 0.0
        %v1059 = vmax.f32 %v1051, 0.0
        %v1060 = vmax.f32 %v1052, 0.0
        %v1061 = vmax.f32 %v1053, 0.0
        %v1062 = vmax.f32 %v1054, %v1055
        %v1063 = vmax.f32 %v1056, %v1057
        %v1064 = vmax.f32 %v1058, %v1059
        %v1065 = vmax.f32 %v1060, %v1061
        %v1066 = vpack.c.bf16 %v1063, %v1062
        %v1067 = vpack.c.bf16 %v1065, %v1064
        %v1068 = vld [vmem:[%s3] sm:$0xf]
        %v1069 = vld [vmem:[%s3 + $0x4] sm:$0x7]
        %v1072 = vunpack.c.l.b16 %v1068
        %v1073 = vunpack.c.l.b16 %v1069
        %v1074 = vpack.c.b16 %v1073, %v1072
        %vm1075 = vcmask 228352
        %v1077 = vsel %vm1075, %v1074, 0
        %vm1079 = vcmask 1045504
        %v1081 = vsel %vm1079, %v1067, 0
        %1083 = vmatprep.subr.bf16.mxu0 0
        %1084 = vmatpush1.bf16.msra.mxu0 0
        %1085 = vmatprep.subr.bf16.mxu0 0
        %1086 = vmatpush1.bf16.msra.mxu0 0
        %1087 = vmatprep.subr.bf16.mxu0 0
        %1088 = vmatpush1.bf16.msra.mxu0 0
        %1089 = vmatprep.subr.bf16.mxu0 0
        %1090 = vmatpush1.bf16.msra.mxu0 0
        %1091 = vmatprep.subr.bf16.mxu0 0
        %1092 = vmatpush1.bf16.msra.mxu0 0
        %1093 = vmatprep.subr.bf16.mxu0 0
        %1094 = vmatpush1.bf16.msra.mxu0 0
        %1095 = vmatprep.subr.bf16.mxu0 0
        %1096 = vmatpush1.bf16.msra.mxu0 %v1081
        %1097 = vmatprep.subr.bf16.mxu0 0
        %1098 = vmatpush1.bf16.msra.mxu0 %v1066
        %1099 = vmatprep.subr.bf16.mxu0 0
        %1100 = vmatpush2.bf16.msra.mxu0 0
        %1101 = vmatprep.subr.bf16.mxu0 0
        %1102 = vmatpush2.bf16.msra.mxu0 0
        %1103 = vmatprep.subr.bf16.mxu0 0
        %1104 = vmatpush2.bf16.msra.mxu0 0
        %1105 = vmatprep.subr.bf16.mxu0 0
        %1106 = vmatpush2.bf16.msra.mxu0 0
        %1107 = vmatprep.subr.bf16.mxu0 0
        %1108 = vmatpush2.bf16.msra.mxu0 0
        %1109 = vmatprep.subr.bf16.mxu0 0
        %1110 = vmatpush2.bf16.msra.mxu0 0
        %1111 = vmatprep.subr.bf16.mxu0 0
        %1112 = vmatpush2.bf16.msra.mxu0 0
        %1113 = vmatprep.subr.bf16.mxu0 0
        %1114 = vmatpush2.bf16.msra.mxu0 0
        %1115 = vmatprep.mubr.bf16.mxu0 0
        %1116 = vmatmul.mubr.bf16.gmra.mxu0 %v1077
        %v1117 = vpop.f32.mrf.mxu0
        %v1118 = vadd.f32 0.0, %v1117
        %v1119 = vpop.f32.mrf.mxu0
        %v1120 = vpop.f32.mrf.mxu0
        %v1121 = vadd.f32 0.0, %v1120
        %v1122 = vpop.f32.mrf.mxu0
        %1123 = vdwg.mxu0
        %v1124 = vld [vmem:[%s4] sm:$0xf]
        %v1125 = vld [vmem:[%s4 + $0x4] sm:$0x7]
        %v1128 = vunpack.c.l.b16 %v1124
        %v1129 = vunpack.c.l.b16 %v1125
        %v1130 = vpack.c.b16 %v1129, %v1128
        %v1132 = vsel %vm1075, %v1130, 0
        %1134 = vmatprep.subr.bf16.mxu0 0
        %1135 = vmatpush1.bf16.msra.mxu0 0
        %1136 = vmatprep.subr.bf16.mxu0 0
        %1137 = vmatpush1.bf16.msra.mxu0 0
        %1138 = vmatprep.subr.bf16.mxu0 0
        %1139 = vmatpush1.bf16.msra.mxu0 0
        %1140 = vmatprep.subr.bf16.mxu0 0
        %1141 = vmatpush1.bf16.msra.mxu0 0
        %1142 = vmatprep.subr.bf16.mxu0 0
        %1143 = vmatpush1.bf16.msra.mxu0 0
        %1144 = vmatprep.subr.bf16.mxu0 0
        %1145 = vmatpush1.bf16.msra.mxu0 0
        %1146 = vmatprep.subr.bf16.mxu0 0
        %1147 = vmatpush1.bf16.msra.mxu0 %v1081
        %1148 = vmatprep.subr.bf16.mxu0 0
        %1149 = vmatpush1.bf16.msra.mxu0 %v1066
        %1150 = vmatprep.subr.bf16.mxu0 0
        %1151 = vmatpush2.bf16.msra.mxu0 0
        %1152 = vmatprep.subr.bf16.mxu0 0
        %1153 = vmatpush2.bf16.msra.mxu0 0
        %1154 = vmatprep.subr.bf16.mxu0 0
        %1155 = vmatpush2.bf16.msra.mxu0 0
        %1156 = vmatprep.subr.bf16.mxu0 0
        %1157 = vmatpush2.bf16.msra.mxu0 0
        %1158 = vmatprep.subr.bf16.mxu0 0
        %1159 = vmatpush2.bf16.msra.mxu0 0
        %1160 = vmatprep.subr.bf16.mxu0 0
        %1161 = vmatpush2.bf16.msra.mxu0 0
        %1162 = vmatprep.subr.bf16.mxu0 0
        %1163 = vmatpush2.bf16.msra.mxu0 0
        %1164 = vmatprep.subr.bf16.mxu0 0
        %1165 = vmatpush2.bf16.msra.mxu0 0
        %1166 = vmatprep.mubr.bf16.mxu0 0
        %1167 = vmatmul.mubr.bf16.gmra.mxu0 %v1132
        %v1168 = vpop.f32.mrf.mxu0
        %v1169 = vadd.f32 0.0, %v1168
        %v1170 = vpop.f32.mrf.mxu0
        %v1171 = vpop.f32.mrf.mxu0
        %v1172 = vadd.f32 0.0, %v1171
        %v1173 = vpop.f32.mrf.mxu0
        %1174 = vdwg.mxu0
        %v1175 = vmax.f32 %v1118, %v1169
        %v1176 = vmax.f32 %v1121, %v1172
        %v1177 = vpack.c.bf16 %v1176, %v1175
        %v1178 = vld [vmem:[#allocation5] sm:$0xff]
        %v1179 = vld [vmem:[#allocation5 + $0x8] sm:$0xff]
        %v1180 = vld [vmem:[#allocation5 + $0x10] sm:$0xff]
        %v1181 = vld [vmem:[#allocation5 + $0x18] sm:$0xff]
        %v1182 = vld [vmem:[#allocation5 + $0x20] sm:$0xff]
        %v1183 = vld [vmem:[#allocation5 + $0x28] sm:$0xff]
        %v1184 = vld [vmem:[#allocation5 + $0x30] sm:$0xff]
        %v1185 = vld [vmem:[#allocation5 + $0x38] sm:$0xff]
        %v1186 = vld [vmem:[#allocation5 + $0x40] sm:$0xff]
        %v1187 = vld [vmem:[#allocation5 + $0x48] sm:$0xff]
        %v1188 = vld [vmem:[#allocation5 + $0x50] sm:$0xff]
        %v1189 = vld [vmem:[#allocation5 + $0x58] sm:$0xff]
        %v1190 = vld [vmem:[#allocation5 + $0x60] sm:$0xff]
        %v1191 = vld [vmem:[#allocation5 + $0x68] sm:$0xff]
        %v1192 = vld [vmem:[#allocation5 + $0x70] sm:$0xff]
        %v1193 = vld [vmem:[#allocation5 + $0x78] sm:$0xff]
        %s1194 = scalar_lea.vmem [#allocation5], 128
        %v1195 = vld [vmem:[%s1194] sm:$0xff]
        %v1196 = vld [vmem:[%s1194 + $0x8] sm:$0xff]
        %v1197 = vld [vmem:[%s1194 + $0x10] sm:$0xff]
        %v1198 = vld [vmem:[%s1194 + $0x18] sm:$0xff]
        %v1199 = vld [vmem:[%s1194 + $0x20] sm:$0xff]
        %v1200 = vld [vmem:[%s1194 + $0x28] sm:$0xff]
        %v1201 = vld [vmem:[%s1194 + $0x30] sm:$0xff]
        %v1202 = vld [vmem:[%s1194 + $0x38] sm:$0xff]
        %v1203 = vld [vmem:[%s1194 + $0x40] sm:$0xff]
        %v1204 = vld [vmem:[%s1194 + $0x48] sm:$0xff]
        %v1205 = vld [vmem:[%s1194 + $0x50] sm:$0xff]
        %v1206 = vld [vmem:[%s1194 + $0x58] sm:$0xff]
        %v1207 = vld [vmem:[%s1194 + $0x60] sm:$0xff]
        %v1208 = vld [vmem:[%s1194 + $0x68] sm:$0xff]
        %v1209 = vld [vmem:[%s1194 + $0x70] sm:$0xff]
        %v1210 = vld [vmem:[%s1194 + $0x78] sm:$0xff]
        %v1212 = vshrl.u32 %v1177, 16
        %v1214 = vshll.u32 %v1177, 16
        %v1216 = vrot.slane %v1214, 1
        %v1217 = vor.u32 %v1212, %v1216
        %v1235 = vunpack.c.l.b16 %v1195
        %v1236 = vunpack.c.h.b16 %v1195
        %v1237 = vunpack.c.l.b16 %v1196
        %v1238 = vunpack.c.h.b16 %v1196
        %v1239 = vunpack.c.l.b16 %v1197
        %v1240 = vunpack.c.h.b16 %v1197
        %v1241 = vunpack.c.l.b16 %v1198
        %v1242 = vunpack.c.h.b16 %v1198
        %v1243 = vunpack.c.l.b16 %v1199
        %v1244 = vunpack.c.h.b16 %v1199
        %v1245 = vunpack.c.l.b16 %v1200
        %v1246 = vunpack.c.h.b16 %v1200
        %v1247 = vunpack.c.l.b16 %v1201
        %v1248 = vunpack.c.h.b16 %v1201
        %v1249 = vunpack.c.l.b16 %v1202
        %v1250 = vunpack.c.h.b16 %v1202
        %v1251 = vunpack.c.l.b16 %v1203
        %v1252 = vunpack.c.h.b16 %v1203
        %v1253 = vunpack.c.l.b16 %v1204
        %v1254 = vunpack.c.h.b16 %v1204
        %v1255 = vunpack.c.l.b16 %v1205
        %v1256 = vunpack.c.h.b16 %v1205
        %v1257 = vunpack.c.l.b16 %v1206
        %v1258 = vunpack.c.h.b16 %v1206
        %v1259 = vunpack.c.l.b16 %v1207
        %v1260 = vunpack.c.h.b16 %v1207
        %v1261 = vunpack.c.l.b16 %v1208
        %v1262 = vunpack.c.h.b16 %v1208
        %v1263 = vunpack.c.l.b16 %v1209
        %v1264 = vunpack.c.h.b16 %v1209
        %v1265 = vunpack.c.l.b16 %v1210
        %v1266 = vunpack.c.h.b16 %v1210
        %v1267 = vpack.c.b16 %v1237, %v1235
        %v1268 = vpack.c.b16 %v1238, %v1236
        %v1269 = vpack.c.b16 %v1241, %v1239
        %v1270 = vpack.c.b16 %v1242, %v1240
        %v1271 = vpack.c.b16 %v1245, %v1243
        %v1272 = vpack.c.b16 %v1246, %v1244
        %v1273 = vpack.c.b16 %v1249, %v1247
        %v1274 = vpack.c.b16 %v1250, %v1248
        %v1275 = vpack.c.b16 %v1253, %v1251
        %v1276 = vpack.c.b16 %v1254, %v1252
        %v1277 = vpack.c.b16 %v1257, %v1255
        %v1278 = vpack.c.b16 %v1258, %v1256
        %v1279 = vpack.c.b16 %v1261, %v1259
        %v1280 = vpack.c.b16 %v1262, %v1260
        %v1281 = vpack.c.b16 %v1265, %v1263
        %v1282 = vpack.c.b16 %v1266, %v1264
        %1299 = vmatprep.subr.bf16.mxu0 %v1282
        %1300 = vmatpush1.bf16.msra.mxu0 %v1281
        %1301 = vmatprep.subr.bf16.mxu0 %v1280
        %1302 = vmatpush1.bf16.msra.mxu0 %v1279
        %1303 = vmatprep.subr.bf16.mxu0 %v1278
        %1304 = vmatpush1.bf16.msra.mxu0 %v1277
        %1305 = vmatprep.subr.bf16.mxu0 %v1276
        %1306 = vmatpush1.bf16.msra.mxu0 %v1275
        %1307 = vmatprep.subr.bf16.mxu0 %v1274
        %1308 = vmatpush1.bf16.msra.mxu0 %v1273
        %1309 = vmatprep.subr.bf16.mxu0 %v1272
        %1310 = vmatpush1.bf16.msra.mxu0 %v1271
        %1311 = vmatprep.subr.bf16.mxu0 %v1270
        %1312 = vmatpush1.bf16.msra.mxu0 %v1269
        %1313 = vmatprep.subr.bf16.mxu0 %v1268
        %1314 = vmatpush1.bf16.msra.mxu0 %v1267
        %1315 = vmatprep.subr.bf16.mxu0 0
        %1316 = vmatpush2.bf16.msra.mxu0 0
        %1317 = vmatprep.subr.bf16.mxu0 0
        %1318 = vmatpush2.bf16.msra.mxu0 0
        %1319 = vmatprep.subr.bf16.mxu0 0
        %1320 = vmatpush2.bf16.msra.mxu0 0
        %1321 = vmatprep.subr.bf16.mxu0 0
        %1322 = vmatpush2.bf16.msra.mxu0 0
        %1323 = vmatprep.subr.bf16.mxu0 0
        %1324 = vmatpush2.bf16.msra.mxu0 0
        %1325 = vmatprep.subr.bf16.mxu0 0
        %1326 = vmatpush2.bf16.msra.mxu0 0
        %1327 = vmatprep.subr.bf16.mxu0 0
        %1328 = vmatpush2.bf16.msra.mxu0 0
        %1329 = vmatprep.subr.bf16.mxu0 0
        %1330 = vmatpush2.bf16.msra.mxu0 0
        %1331 = vmatprep.mubr.bf16.mxu0 0
        %1332 = vmatmul.mubr.bf16.gmra.mxu0 %v1217
        %v1333 = vpop.f32.mrf.mxu0
        %v1334 = vadd.f32 0.0, %v1333
        %v1335 = vpop.f32.mrf.mxu0
        %v1336 = vadd.f32 0.0, %v1335
        %v1337 = vpop.f32.mrf.mxu0
        %v1338 = vadd.f32 0.0, %v1337
        %v1339 = vpop.f32.mrf.mxu0
        %v1340 = vadd.f32 0.0, %v1339
        %1341 = vdwg.mxu0
        %v1358 = vunpack.c.l.b16 %v1178
        %v1359 = vunpack.c.h.b16 %v1178
        %v1360 = vunpack.c.l.b16 %v1179
        %v1361 = vunpack.c.h.b16 %v1179
        %v1362 = vunpack.c.l.b16 %v1180
        %v1363 = vunpack.c.h.b16 %v1180
        %v1364 = vunpack.c.l.b16 %v1181
        %v1365 = vunpack.c.h.b16 %v1181
        %v1366 = vunpack.c.l.b16 %v1182
        %v1367 = vunpack.c.h.b16 %v1182
        %v1368 = vunpack.c.l.b16 %v1183
        %v1369 = vunpack.c.h.b16 %v1183
        %v1370 = vunpack.c.l.b16 %v1184
        %v1371 = vunpack.c.h.b16 %v1184
        %v1372 = vunpack.c.l.b16 %v1185
        %v1373 = vunpack.c.h.b16 %v1185
        %v1374 = vunpack.c.l.b16 %v1186
        %v1375 = vunpack.c.h.b16 %v1186
        %v1376 = vunpack.c.l.b16 %v1187
        %v1377 = vunpack.c.h.b16 %v1187
        %v1378 = vunpack.c.l.b16 %v1188
        %v1379 = vunpack.c.h.b16 %v1188
        %v1380 = vunpack.c.l.b16 %v1189
        %v1381 = vunpack.c.h.b16 %v1189
        %v1382 = vunpack.c.l.b16 %v1190
        %v1383 = vunpack.c.h.b16 %v1190
        %v1384 = vunpack.c.l.b16 %v1191
        %v1385 = vunpack.c.h.b16 %v1191
        %v1386 = vunpack.c.l.b16 %v1192
        %v1387 = vunpack.c.h.b16 %v1192
        %v1388 = vunpack.c.l.b16 %v1193
        %v1389 = vunpack.c.h.b16 %v1193
        %v1390 = vpack.c.b16 %v1360, %v1358
        %v1391 = vpack.c.b16 %v1361, %v1359
        %v1392 = vpack.c.b16 %v1364, %v1362
        %v1393 = vpack.c.b16 %v1365, %v1363
        %v1394 = vpack.c.b16 %v1368, %v1366
        %v1395 = vpack.c.b16 %v1369, %v1367
        %v1396 = vpack.c.b16 %v1372, %v1370
        %v1397 = vpack.c.b16 %v1373, %v1371
        %v1398 = vpack.c.b16 %v1376, %v1374
        %v1399 = vpack.c.b16 %v1377, %v1375
        %v1400 = vpack.c.b16 %v1380, %v1378
        %v1401 = vpack.c.b16 %v1381, %v1379
        %v1402 = vpack.c.b16 %v1384, %v1382
        %v1403 = vpack.c.b16 %v1385, %v1383
        %v1404 = vpack.c.b16 %v1388, %v1386
        %v1405 = vpack.c.b16 %v1389, %v1387
        %1422 = vmatprep.subr.bf16.mxu0 %v1405
        %1423 = vmatpush1.bf16.msra.mxu0 %v1404
        %1424 = vmatprep.subr.bf16.mxu0 %v1403
        %1425 = vmatpush1.bf16.msra.mxu0 %v1402
        %1426 = vmatprep.subr.bf16.mxu0 %v1401
        %1427 = vmatpush1.bf16.msra.mxu0 %v1400
        %1428 = vmatprep.subr.bf16.mxu0 %v1399
        %1429 = vmatpush1.bf16.msra.mxu0 %v1398
        %1430 = vmatprep.subr.bf16.mxu0 %v1397
        %1431 = vmatpush1.bf16.msra.mxu0 %v1396
        %1432 = vmatprep.subr.bf16.mxu0 %v1395
        %1433 = vmatpush1.bf16.msra.mxu0 %v1394
        %1434 = vmatprep.subr.bf16.mxu0 %v1393
        %1435 = vmatpush1.bf16.msra.mxu0 %v1392
        %1436 = vmatprep.subr.bf16.mxu0 %v1391
        %1437 = vmatpush1.bf16.msra.mxu0 %v1390
        %1438 = vmatprep.subr.bf16.mxu0 0
        %1439 = vmatpush2.bf16.msra.mxu0 0
        %1440 = vmatprep.subr.bf16.mxu0 0
        %1441 = vmatpush2.bf16.msra.mxu0 0
        %1442 = vmatprep.subr.bf16.mxu0 0
        %1443 = vmatpush2.bf16.msra.mxu0 0
        %1444 = vmatprep.subr.bf16.mxu0 0
        %1445 = vmatpush2.bf16.msra.mxu0 0
        %1446 = vmatprep.subr.bf16.mxu0 0
        %1447 = vmatpush2.bf16.msra.mxu0 0
        %1448 = vmatprep.subr.bf16.mxu0 0
        %1449 = vmatpush2.bf16.msra.mxu0 0
        %1450 = vmatprep.subr.bf16.mxu0 0
        %1451 = vmatpush2.bf16.msra.mxu0 0
        %1452 = vmatprep.subr.bf16.mxu0 0
        %1453 = vmatpush2.bf16.msra.mxu0 0
        %1454 = vmatprep.mubr.bf16.mxu0 0
        %1455 = vmatmul.mubr.bf16.gmra.mxu0 %v1177
        %v1456 = vpop.f32.mrf.mxu0
        %v1457 = vadd.f32 %v1334, %v1456
        %v1458 = vpop.f32.mrf.mxu0
        %v1459 = vadd.f32 %v1336, %v1458
        %v1460 = vpop.f32.mrf.mxu0
        %v1461 = vadd.f32 %v1338, %v1460
        %v1462 = vpop.f32.mrf.mxu0
        %v1463 = vadd.f32 %v1340, %v1462
        %1464 = vdwg.mxu0
        %s1465 = scalar_lea.vmem [#allocation5], 256
        %v1466 = vld [vmem:[%s1465] sm:$0xff]
        %v1467 = vld [vmem:[%s1465 + $0x8] sm:$0xff]
        %v1468 = vld [vmem:[%s1465 + $0x10] sm:$0xff]
        %v1469 = vld [vmem:[%s1465 + $0x18] sm:$0xff]
        %v1470 = vld [vmem:[%s1465 + $0x20] sm:$0xff]
        %v1471 = vld [vmem:[%s1465 + $0x28] sm:$0xff]
        %v1472 = vld [vmem:[%s1465 + $0x30] sm:$0xff]
        %v1473 = vld [vmem:[%s1465 + $0x38] sm:$0xff]
        %v1474 = vld [vmem:[%s1465 + $0x40] sm:$0xff]
        %v1475 = vld [vmem:[%s1465 + $0x48] sm:$0xff]
        %v1476 = vld [vmem:[%s1465 + $0x50] sm:$0xff]
        %v1477 = vld [vmem:[%s1465 + $0x58] sm:$0xff]
        %v1478 = vld [vmem:[%s1465 + $0x60] sm:$0xff]
        %v1479 = vld [vmem:[%s1465 + $0x68] sm:$0xff]
        %v1480 = vld [vmem:[%s1465 + $0x70] sm:$0xff]
        %v1481 = vld [vmem:[%s1465 + $0x78] sm:$0xff]
        %v1483 = vrot.slane %v1177, 1
        %v1501 = vunpack.c.l.b16 %v1466
        %v1502 = vunpack.c.h.b16 %v1466
        %v1503 = vunpack.c.l.b16 %v1467
        %v1504 = vunpack.c.h.b16 %v1467
        %v1505 = vunpack.c.l.b16 %v1468
        %v1506 = vunpack.c.h.b16 %v1468
        %v1507 = vunpack.c.l.b16 %v1469
        %v1508 = vunpack.c.h.b16 %v1469
        %v1509 = vunpack.c.l.b16 %v1470
        %v1510 = vunpack.c.h.b16 %v1470
        %v1511 = vunpack.c.l.b16 %v1471
        %v1512 = vunpack.c.h.b16 %v1471
        %v1513 = vunpack.c.l.b16 %v1472
        %v1514 = vunpack.c.h.b16 %v1472
        %v1515 = vunpack.c.l.b16 %v1473
        %v1516 = vunpack.c.h.b16 %v1473
        %v1517 = vunpack.c.l.b16 %v1474
        %v1518 = vunpack.c.h.b16 %v1474
        %v1519 = vunpack.c.l.b16 %v1475
        %v1520 = vunpack.c.h.b16 %v1475
        %v1521 = vunpack.c.l.b16 %v1476
        %v1522 = vunpack.c.h.b16 %v1476
        %v1523 = vunpack.c.l.b16 %v1477
        %v1524 = vunpack.c.h.b16 %v1477
        %v1525 = vunpack.c.l.b16 %v1478
        %v1526 = vunpack.c.h.b16 %v1478
        %v1527 = vunpack.c.l.b16 %v1479
        %v1528 = vunpack.c.h.b16 %v1479
        %v1529 = vunpack.c.l.b16 %v1480
        %v1530 = vunpack.c.h.b16 %v1480
        %v1531 = vunpack.c.l.b16 %v1481
        %v1532 = vunpack.c.h.b16 %v1481
        %v1533 = vpack.c.b16 %v1503, %v1501
        %v1534 = vpack.c.b16 %v1504, %v1502
        %v1535 = vpack.c.b16 %v1507, %v1505
        %v1536 = vpack.c.b16 %v1508, %v1506
        %v1537 = vpack.c.b16 %v1511, %v1509
        %v1538 = vpack.c.b16 %v1512, %v1510
        %v1539 = vpack.c.b16 %v1515, %v1513
        %v1540 = vpack.c.b16 %v1516, %v1514
        %v1541 = vpack.c.b16 %v1519, %v1517
        %v1542 = vpack.c.b16 %v1520, %v1518
        %v1543 = vpack.c.b16 %v1523, %v1521
        %v1544 = vpack.c.b16 %v1524, %v1522
        %v1545 = vpack.c.b16 %v1527, %v1525
        %v1546 = vpack.c.b16 %v1528, %v1526
        %v1547 = vpack.c.b16 %v1531, %v1529
        %v1548 = vpack.c.b16 %v1532, %v1530
        %1565 = vmatprep.subr.bf16.mxu0 %v1548
        %1566 = vmatpush1.bf16.msra.mxu0 %v1547
        %1567 = vmatprep.subr.bf16.mxu0 %v1546
        %1568 = vmatpush1.bf16.msra.mxu0 %v1545
        %1569 = vmatprep.subr.bf16.mxu0 %v1544
        %1570 = vmatpush1.bf16.msra.mxu0 %v1543
        %1571 = vmatprep.subr.bf16.mxu0 %v1542
        %1572 = vmatpush1.bf16.msra.mxu0 %v1541
        %1573 = vmatprep.subr.bf16.mxu0 %v1540
        %1574 = vmatpush1.bf16.msra.mxu0 %v1539
        %1575 = vmatprep.subr.bf16.mxu0 %v1538
        %1576 = vmatpush1.bf16.msra.mxu0 %v1537
        %1577 = vmatprep.subr.bf16.mxu0 %v1536
        %1578 = vmatpush1.bf16.msra.mxu0 %v1535
        %1579 = vmatprep.subr.bf16.mxu0 %v1534
        %1580 = vmatpush1.bf16.msra.mxu0 %v1533
        %1581 = vmatprep.subr.bf16.mxu0 0
        %1582 = vmatpush2.bf16.msra.mxu0 0
        %1583 = vmatprep.subr.bf16.mxu0 0
        %1584 = vmatpush2.bf16.msra.mxu0 0
        %1585 = vmatprep.subr.bf16.mxu0 0
        %1586 = vmatpush2.bf16.msra.mxu0 0
        %1587 = vmatprep.subr.bf16.mxu0 0
        %1588 = vmatpush2.bf16.msra.mxu0 0
        %1589 = vmatprep.subr.bf16.mxu0 0
        %1590 = vmatpush2.bf16.msra.mxu0 0
        %1591 = vmatprep.subr.bf16.mxu0 0
        %1592 = vmatpush2.bf16.msra.mxu0 0
        %1593 = vmatprep.subr.bf16.mxu0 0
        %1594 = vmatpush2.bf16.msra.mxu0 0
        %1595 = vmatprep.subr.bf16.mxu0 0
        %1596 = vmatpush2.bf16.msra.mxu0 0
        %1597 = vmatprep.mubr.bf16.mxu0 0
        %1598 = vmatmul.mubr.bf16.gmra.mxu0 %v1483
        %v1599 = vpop.f32.mrf.mxu0
        %v1600 = vadd.f32 0.0, %v1599
        %v1601 = vpop.f32.mrf.mxu0
        %v1602 = vadd.f32 0.0, %v1601
        %v1603 = vpop.f32.mrf.mxu0
        %v1604 = vadd.f32 0.0, %v1603
        %v1605 = vpop.f32.mrf.mxu0
        %v1606 = vadd.f32 0.0, %v1605
        %1607 = vdwg.mxu0
        %v1608 = vadd.f32 %v1457, %v1600
        %v1609 = vadd.f32 %v1459, %v1602
        %v1610 = vadd.f32 %v1461, %v1604
        %v1611 = vadd.f32 %v1463, %v1606
        %s1612 = scalar_lea.vmem [#allocation5], 384
        %v1613 = vld [vmem:[%s1612] sm:$0xff]
        %v1614 = vld [vmem:[%s1612 + $0x8] sm:$0xff]
        %v1615 = vld [vmem:[%s1612 + $0x10] sm:$0xff]
        %v1616 = vld [vmem:[%s1612 + $0x18] sm:$0xff]
        %v1617 = vld [vmem:[%s1612 + $0x20] sm:$0xff]
        %v1618 = vld [vmem:[%s1612 + $0x28] sm:$0xff]
        %v1619 = vld [vmem:[%s1612 + $0x30] sm:$0xff]
        %v1620 = vld [vmem:[%s1612 + $0x38] sm:$0xff]
        %v1621 = vld [vmem:[%s1612 + $0x40] sm:$0xff]
        %v1622 = vld [vmem:[%s1612 + $0x48] sm:$0xff]
        %v1623 = vld [vmem:[%s1612 + $0x50] sm:$0xff]
        %v1624 = vld [vmem:[%s1612 + $0x58] sm:$0xff]
        %v1625 = vld [vmem:[%s1612 + $0x60] sm:$0xff]
        %v1626 = vld [vmem:[%s1612 + $0x68] sm:$0xff]
        %v1627 = vld [vmem:[%s1612 + $0x70] sm:$0xff]
        %v1628 = vld [vmem:[%s1612 + $0x78] sm:$0xff]
        %v1629 = vrot.slane %v1212, 1
        %v1630 = vrot.slane %v1214, 2
        %v1631 = vor.u32 %v1629, %v1630
        %v1649 = vunpack.c.l.b16 %v1613
        %v1650 = vunpack.c.h.b16 %v1613
        %v1651 = vunpack.c.l.b16 %v1614
        %v1652 = vunpack.c.h.b16 %v1614
        %v1653 = vunpack.c.l.b16 %v1615
        %v1654 = vunpack.c.h.b16 %v1615
        %v1655 = vunpack.c.l.b16 %v1616
        %v1656 = vunpack.c.h.b16 %v1616
        %v1657 = vunpack.c.l.b16 %v1617
        %v1658 = vunpack.c.h.b16 %v1617
        %v1659 = vunpack.c.l.b16 %v1618
        %v1660 = vunpack.c.h.b16 %v1618
        %v1661 = vunpack.c.l.b16 %v1619
        %v1662 = vunpack.c.h.b16 %v1619
        %v1663 = vunpack.c.l.b16 %v1620
        %v1664 = vunpack.c.h.b16 %v1620
        %v1665 = vunpack.c.l.b16 %v1621
        %v1666 = vunpack.c.h.b16 %v1621
        %v1667 = vunpack.c.l.b16 %v1622
        %v1668 = vunpack.c.h.b16 %v1622
        %v1669 = vunpack.c.l.b16 %v1623
        %v1670 = vunpack.c.h.b16 %v1623
        %v1671 = vunpack.c.l.b16 %v1624
        %v1672 = vunpack.c.h.b16 %v1624
        %v1673 = vunpack.c.l.b16 %v1625
        %v1674 = vunpack.c.h.b16 %v1625
        %v1675 = vunpack.c.l.b16 %v1626
        %v1676 = vunpack.c.h.b16 %v1626
        %v1677 = vunpack.c.l.b16 %v1627
        %v1678 = vunpack.c.h.b16 %v1627
        %v1679 = vunpack.c.l.b16 %v1628
        %v1680 = vunpack.c.h.b16 %v1628
        %v1681 = vpack.c.b16 %v1651, %v1649
        %v1682 = vpack.c.b16 %v1652, %v1650
        %v1683 = vpack.c.b16 %v1655, %v1653
        %v1684 = vpack.c.b16 %v1656, %v1654
        %v1685 = vpack.c.b16 %v1659, %v1657
        %v1686 = vpack.c.b16 %v1660, %v1658
        %v1687 = vpack.c.b16 %v1663, %v1661
        %v1688 = vpack.c.b16 %v1664, %v1662
        %v1689 = vpack.c.b16 %v1667, %v1665
        %v1690 = vpack.c.b16 %v1668, %v1666
        %v1691 = vpack.c.b16 %v1671, %v1669
        %v1692 = vpack.c.b16 %v1672, %v1670
        %v1693 = vpack.c.b16 %v1675, %v1673
        %v1694 = vpack.c.b16 %v1676, %v1674
        %v1695 = vpack.c.b16 %v1679, %v1677
        %v1696 = vpack.c.b16 %v1680, %v1678
        %1713 = vmatprep.subr.bf16.mxu0 %v1696
        %1714 = vmatpush1.bf16.msra.mxu0 %v1695
        %1715 = vmatprep.subr.bf16.mxu0 %v1694
        %1716 = vmatpush1.bf16.msra.mxu0 %v1693
        %1717 = vmatprep.subr.bf16.mxu0 %v1692
        %1718 = vmatpush1.bf16.msra.mxu0 %v1691
        %1719 = vmatprep.subr.bf16.mxu0 %v1690
        %1720 = vmatpush1.bf16.msra.mxu0 %v1689
        %1721 = vmatprep.subr.bf16.mxu0 %v1688
        %1722 = vmatpush1.bf16.msra.mxu0 %v1687
        %1723 = vmatprep.subr.bf16.mxu0 %v1686
        %1724 = vmatpush1.bf16.msra.mxu0 %v1685
        %1725 = vmatprep.subr.bf16.mxu0 %v1684
        %1726 = vmatpush1.bf16.msra.mxu0 %v1683
        %1727 = vmatprep.subr.bf16.mxu0 %v1682
        %1728 = vmatpush1.bf16.msra.mxu0 %v1681
        %1729 = vmatprep.subr.bf16.mxu0 0
        %1730 = vmatpush2.bf16.msra.mxu0 0
        %1731 = vmatprep.subr.bf16.mxu0 0
        %1732 = vmatpush2.bf16.msra.mxu0 0
        %1733 = vmatprep.subr.bf16.mxu0 0
        %1734 = vmatpush2.bf16.msra.mxu0 0
        %1735 = vmatprep.subr.bf16.mxu0 0
        %1736 = vmatpush2.bf16.msra.mxu0 0
        %1737 = vmatprep.subr.bf16.mxu0 0
        %1738 = vmatpush2.bf16.msra.mxu0 0
        %1739 = vmatprep.subr.bf16.mxu0 0
        %1740 = vmatpush2.bf16.msra.mxu0 0
        %1741 = vmatprep.subr.bf16.mxu0 0
        %1742 = vmatpush2.bf16.msra.mxu0 0
        %1743 = vmatprep.subr.bf16.mxu0 0
        %1744 = vmatpush2.bf16.msra.mxu0 0
        %1745 = vmatprep.mubr.bf16.mxu0 0
        %1746 = vmatmul.mubr.bf16.gmra.mxu0 %v1631
        %v1747 = vpop.f32.mrf.mxu0
        %v1748 = vadd.f32 0.0, %v1747
        %v1749 = vpop.f32.mrf.mxu0
        %v1750 = vadd.f32 0.0, %v1749
        %v1751 = vpop.f32.mrf.mxu0
        %v1752 = vadd.f32 0.0, %v1751
        %v1753 = vpop.f32.mrf.mxu0
        %v1754 = vadd.f32 0.0, %v1753
        %1755 = vdwg.mxu0
        %v1756 = vadd.f32 %v1608, %v1748
        %v1757 = vadd.f32 %v1609, %v1750
        %v1758 = vadd.f32 %v1610, %v1752
        %v1759 = vadd.f32 %v1611, %v1754
        %s1760 = scalar_lea.vmem [#allocation5], 512
        %v1761 = vld [vmem:[%s1760] sm:$0xff]
        %v1762 = vld [vmem:[%s1760 + $0x8] sm:$0xff]
        %v1763 = vld [vmem:[%s1760 + $0x10] sm:$0xff]
        %v1764 = vld [vmem:[%s1760 + $0x18] sm:$0xff]
        %v1765 = vld [vmem:[%s1760 + $0x20] sm:$0xff]
        %v1766 = vld [vmem:[%s1760 + $0x28] sm:$0xff]
        %v1767 = vld [vmem:[%s1760 + $0x30] sm:$0xff]
        %v1768 = vld [vmem:[%s1760 + $0x38] sm:$0xff]
        %v1769 = vld [vmem:[%s1760 + $0x40] sm:$0xff]
        %v1770 = vld [vmem:[%s1760 + $0x48] sm:$0xff]
        %v1771 = vld [vmem:[%s1760 + $0x50] sm:$0xff]
        %v1772 = vld [vmem:[%s1760 + $0x58] sm:$0xff]
        %v1773 = vld [vmem:[%s1760 + $0x60] sm:$0xff]
        %v1774 = vld [vmem:[%s1760 + $0x68] sm:$0xff]
        %v1775 = vld [vmem:[%s1760 + $0x70] sm:$0xff]
        %v1776 = vld [vmem:[%s1760 + $0x78] sm:$0xff]
        %v1777 = vrot.slane %v1177, 2
        %v1795 = vunpack.c.l.b16 %v1761
        %v1796 = vunpack.c.h.b16 %v1761
        %v1797 = vunpack.c.l.b16 %v1762
        %v1798 = vunpack.c.h.b16 %v1762
        %v1799 = vunpack.c.l.b16 %v1763
        %v1800 = vunpack.c.h.b16 %v1763
        %v1801 = vunpack.c.l.b16 %v1764
        %v1802 = vunpack.c.h.b16 %v1764
        %v1803 = vunpack.c.l.b16 %v1765
        %v1804 = vunpack.c.h.b16 %v1765
        %v1805 = vunpack.c.l.b16 %v1766
        %v1806 = vunpack.c.h.b16 %v1766
        %v1807 = vunpack.c.l.b16 %v1767
        %v1808 = vunpack.c.h.b16 %v1767
        %v1809 = vunpack.c.l.b16 %v1768
        %v1810 = vunpack.c.h.b16 %v1768
        %v1811 = vunpack.c.l.b16 %v1769
        %v1812 = vunpack.c.h.b16 %v1769
        %v1813 = vunpack.c.l.b16 %v1770
        %v1814 = vunpack.c.h.b16 %v1770
        %v1815 = vunpack.c.l.b16 %v1771
        %v1816 = vunpack.c.h.b16 %v1771
        %v1817 = vunpack.c.l.b16 %v1772
        %v1818 = vunpack.c.h.b16 %v1772
        %v1819 = vunpack.c.l.b16 %v1773
        %v1820 = vunpack.c.h.b16 %v1773
        %v1821 = vunpack.c.l.b16 %v1774
        %v1822 = vunpack.c.h.b16 %v1774
        %v1823 = vunpack.c.l.b16 %v1775
        %v1824 = vunpack.c.h.b16 %v1775
        %v1825 = vunpack.c.l.b16 %v1776
        %v1826 = vunpack.c.h.b16 %v1776
        %v1827 = vpack.c.b16 %v1797, %v1795
        %v1828 = vpack.c.b16 %v1798, %v1796
        %v1829 = vpack.c.b16 %v1801, %v1799
        %v1830 = vpack.c.b16 %v1802, %v1800
        %v1831 = vpack.c.b16 %v1805, %v1803
        %v1832 = vpack.c.b16 %v1806, %v1804
        %v1833 = vpack.c.b16 %v1809, %v1807
        %v1834 = vpack.c.b16 %v1810, %v1808
        %v1835 = vpack.c.b16 %v1813, %v1811
        %v1836 = vpack.c.b16 %v1814, %v1812
        %v1837 = vpack.c.b16 %v1817, %v1815
        %v1838 = vpack.c.b16 %v1818, %v1816
        %v1839 = vpack.c.b16 %v1821, %v1819
        %v1840 = vpack.c.b16 %v1822, %v1820
        %v1841 = vpack.c.b16 %v1825, %v1823
        %v1842 = vpack.c.b16 %v1826, %v1824
        %1859 = vmatprep.subr.bf16.mxu0 %v1842
        %1860 = vmatpush1.bf16.msra.mxu0 %v1841
        %1861 = vmatprep.subr.bf16.mxu0 %v1840
        %1862 = vmatpush1.bf16.msra.mxu0 %v1839
        %1863 = vmatprep.subr.bf16.mxu0 %v1838
        %1864 = vmatpush1.bf16.msra.mxu0 %v1837
        %1865 = vmatprep.subr.bf16.mxu0 %v1836
        %1866 = vmatpush1.bf16.msra.mxu0 %v1835
        %1867 = vmatprep.subr.bf16.mxu0 %v1834
        %1868 = vmatpush1.bf16.msra.mxu0 %v1833
        %1869 = vmatprep.subr.bf16.mxu0 %v1832
        %1870 = vmatpush1.bf16.msra.mxu0 %v1831
        %1871 = vmatprep.subr.bf16.mxu0 %v1830
        %1872 = vmatpush1.bf16.msra.mxu0 %v1829
        %1873 = vmatprep.subr.bf16.mxu0 %v1828
        %1874 = vmatpush1.bf16.msra.mxu0 %v1827
        %1875 = vmatprep.subr.bf16.mxu0 0
        %1876 = vmatpush2.bf16.msra.mxu0 0
        %1877 = vmatprep.subr.bf16.mxu0 0
        %1878 = vmatpush2.bf16.msra.mxu0 0
        %1879 = vmatprep.subr.bf16.mxu0 0
        %1880 = vmatpush2.bf16.msra.mxu0 0
        %1881 = vmatprep.subr.bf16.mxu0 0
        %1882 = vmatpush2.bf16.msra.mxu0 0
        %1883 = vmatprep.subr.bf16.mxu0 0
        %1884 = vmatpush2.bf16.msra.mxu0 0
        %1885 = vmatprep.subr.bf16.mxu0 0
        %1886 = vmatpush2.bf16.msra.mxu0 0
        %1887 = vmatprep.subr.bf16.mxu0 0
        %1888 = vmatpush2.bf16.msra.mxu0 0
        %1889 = vmatprep.subr.bf16.mxu0 0
        %1890 = vmatpush2.bf16.msra.mxu0 0
        %1891 = vmatprep.mubr.bf16.mxu0 0
        %1892 = vmatmul.mubr.bf16.gmra.mxu0 %v1777
        %v1893 = vpop.f32.mrf.mxu0
        %v1894 = vadd.f32 0.0, %v1893
        %v1895 = vpop.f32.mrf.mxu0
        %v1896 = vadd.f32 0.0, %v1895
        %v1897 = vpop.f32.mrf.mxu0
        %v1898 = vadd.f32 0.0, %v1897
        %v1899 = vpop.f32.mrf.mxu0
        %v1900 = vadd.f32 0.0, %v1899
        %1901 = vdwg.mxu0
        %v1902 = vadd.f32 %v1756, %v1894
        %v1903 = vadd.f32 %v1757, %v1896
        %v1904 = vadd.f32 %v1758, %v1898
        %v1905 = vadd.f32 %v1759, %v1900
        %v1906 = vld [vmem:[%s6] sm:$0x3]
        %v1908 = vlaneseq
        %v1909 = vshrl.u32 %v1908, 7
        %v1910 = vsub.s32 0, %v1909
        %v1911 = vrot.slane %v1906, %v1910
        %v1912 = vlaneseq
        %v1913 = vshrl.u32 %v1912, 7
        %v1914 = vsub.s32 1, %v1913
        %v1915 = vrot.slane %v1906, %v1914
        %v1918 = vadd.f32 %v1902, %v1911
        %v1919 = vadd.f32 %v1903, %v1915
        %v1920 = vadd.f32 %v1904, %v1911
        %v1921 = vadd.f32 %v1905, %v1915
        %v1922 = vmax.f32 %v1918, 0.0
        %v1923 = vmax.f32 %v1919, 0.0
        %v1924 = vmax.f32 %v1920, 0.0
        %v1925 = vmax.f32 %v1921, 0.0
        %v1926 = vmax.f32 %v1922, %v1923
        %v1927 = vmax.f32 %v1924, %v1925
        %v1928 = vpack.c.bf16 %v1927, %v1926
        %v1929 = vld [vmem:[%s7] sm:$0x7]
        %vm1930 = vcmask 80896
        %v1932 = vsel %vm1930, %v1929, 0
        %vm1934 = vcmask 1044480
        %v1936 = vsel %vm1934, %v1928, 0
        %1938 = vmatprep.subr.bf16.mxu0 0
        %1939 = vmatpush1.bf16.msra.mxu0 0
        %1940 = vmatprep.subr.bf16.mxu0 0
        %1941 = vmatpush1.bf16.msra.mxu0 0
        %1942 = vmatprep.subr.bf16.mxu0 0
        %1943 = vmatpush1.bf16.msra.mxu0 0
        %1944 = vmatprep.subr.bf16.mxu0 0
        %1945 = vmatpush1.bf16.msra.mxu0 0
        %1946 = vmatprep.subr.bf16.mxu0 0
        %1947 = vmatpush1.bf16.msra.mxu0 0
        %1948 = vmatprep.subr.bf16.mxu0 0
        %1949 = vmatpush1.bf16.msra.mxu0 0
        %1950 = vmatprep.subr.bf16.mxu0 0
        %1951 = vmatpush1.bf16.msra.mxu0 0
        %1952 = vmatprep.subr.bf16.mxu0 0
        %1953 = vmatpush1.bf16.msra.mxu0 %v1936
        %1954 = vmatprep.subr.bf16.mxu0 0
        %1955 = vmatpush2.bf16.msra.mxu0 0
        %1956 = vmatprep.subr.bf16.mxu0 0
        %1957 = vmatpush2.bf16.msra.mxu0 0
        %1958 = vmatprep.subr.bf16.mxu0 0
        %1959 = vmatpush2.bf16.msra.mxu0 0
        %1960 = vmatprep.subr.bf16.mxu0 0
        %1961 = vmatpush2.bf16.msra.mxu0 0
        %1962 = vmatprep.subr.bf16.mxu0 0
        %1963 = vmatpush2.bf16.msra.mxu0 0
        %1964 = vmatprep.subr.bf16.mxu0 0
        %1965 = vmatpush2.bf16.msra.mxu0 0
        %1966 = vmatprep.subr.bf16.mxu0 0
        %1967 = vmatpush2.bf16.msra.mxu0 0
        %1968 = vmatprep.subr.bf16.mxu0 0
        %1969 = vmatpush2.bf16.msra.mxu0 0
        %1970 = vmatprep.mubr.bf16.mxu0 0
        %1971 = vmatmul.mubr.bf16.gmra.mxu0 %v1932
        %v1972 = vpop.f32.mrf.mxu0
        %v1973 = vadd.f32 0.0, %v1972
        %v1974 = vpop.f32.mrf.mxu0
        %v1975 = vpop.f32.mrf.mxu0
        %v1976 = vpop.f32.mrf.mxu0
        %1977 = vdwg.mxu0
        %v1978 = vld [vmem:[%s8] sm:$0x7]
        %v1980 = vsel %vm1930, %v1978, 0
        %1982 = vmatprep.subr.bf16.mxu0 0
        %1983 = vmatpush1.bf16.msra.mxu0 0
        %1984 = vmatprep.subr.bf16.mxu0 0
        %1985 = vmatpush1.bf16.msra.mxu0 0
        %1986 = vmatprep.subr.bf16.mxu0 0
        %1987 = vmatpush1.bf16.msra.mxu0 0
        %1988 = vmatprep.subr.bf16.mxu0 0
        %1989 = vmatpush1.bf16.msra.mxu0 0
        %1990 = vmatprep.subr.bf16.mxu0 0
        %1991 = vmatpush1.bf16.msra.mxu0 0
        %1992 = vmatprep.subr.bf16.mxu0 0
        %1993 = vmatpush1.bf16.msra.mxu0 0
        %1994 = vmatprep.subr.bf16.mxu0 0
        %1995 = vmatpush1.bf16.msra.mxu0 0
        %1996 = vmatprep.subr.bf16.mxu0 0
        %1997 = vmatpush1.bf16.msra.mxu0 %v1936
        %1998 = vmatprep.subr.bf16.mxu0 0
        %1999 = vmatpush2.bf16.msra.mxu0 0
        %2000 = vmatprep.subr.bf16.mxu0 0
        %2001 = vmatpush2.bf16.msra.mxu0 0
        %2002 = vmatprep.subr.bf16.mxu0 0
        %2003 = vmatpush2.bf16.msra.mxu0 0
        %2004 = vmatprep.subr.bf16.mxu0 0
        %2005 = vmatpush2.bf16.msra.mxu0 0
        %2006 = vmatprep.subr.bf16.mxu0 0
        %2007 = vmatpush2.bf16.msra.mxu0 0
        %2008 = vmatprep.subr.bf16.mxu0 0
        %2009 = vmatpush2.bf16.msra.mxu0 0
        %2010 = vmatprep.subr.bf16.mxu0 0
        %2011 = vmatpush2.bf16.msra.mxu0 0
        %2012 = vmatprep.subr.bf16.mxu0 0
        %2013 = vmatpush2.bf16.msra.mxu0 0
        %2014 = vmatprep.mubr.bf16.mxu0 0
        %2015 = vmatmul.mubr.bf16.gmra.mxu0 %v1980
        %v2016 = vpop.f32.mrf.mxu0
        %v2017 = vadd.f32 0.0, %v2016
        %v2018 = vpop.f32.mrf.mxu0
        %v2019 = vpop.f32.mrf.mxu0
        %v2020 = vpop.f32.mrf.mxu0
        %2021 = vdwg.mxu0
        %v2022 = vmax.f32 %v1973, %v2017
        %v2023 = vpack.c.bf16 %v2022, %v2022
        %v2024 = vld [vmem:[%s9] sm:$0xf]
        %v2025 = vld [vmem:[%s9 + $0x4] sm:$0xf]
        %v2026 = vld [vmem:[%s9 + $0x8] sm:$0xf]
        %v2027 = vld [vmem:[%s9 + $0xc] sm:$0xf]
        %v2028 = vld [vmem:[%s9 + $0x10] sm:$0xf]
        %v2029 = vld [vmem:[%s9 + $0x14] sm:$0xf]
        %v2030 = vld [vmem:[%s9 + $0x18] sm:$0xf]
        %v2031 = vld [vmem:[%s9 + $0x1c] sm:$0xf]
        %v2032 = vld [vmem:[%s9 + $0x20] sm:$0xf]
        %v2033 = vld [vmem:[%s9 + $0x24] sm:$0xf]
        %v2034 = vld [vmem:[%s9 + $0x28] sm:$0xf]
        %v2035 = vld [vmem:[%s9 + $0x2c] sm:$0xf]
        %v2036 = vld [vmem:[%s9 + $0x30] sm:$0xf]
        %v2037 = vld [vmem:[%s9 + $0x34] sm:$0xf]
        %v2038 = vld [vmem:[%s9 + $0x38] sm:$0xf]
        %v2039 = vld [vmem:[%s9 + $0x3c] sm:$0xf]
        %s2040 = scalar_lea.vmem %s9, 64
        %v2041 = vld [vmem:[%s2040] sm:$0xf]
        %v2042 = vld [vmem:[%s2040 + $0x4] sm:$0xf]
        %v2043 = vld [vmem:[%s2040 + $0x8] sm:$0xf]
        %v2044 = vld [vmem:[%s2040 + $0xc] sm:$0xf]
        %v2045 = vld [vmem:[%s2040 + $0x10] sm:$0xf]
        %v2046 = vld [vmem:[%s2040 + $0x14] sm:$0xf]
        %v2047 = vld [vmem:[%s2040 + $0x18] sm:$0xf]
        %v2048 = vld [vmem:[%s2040 + $0x1c] sm:$0xf]
        %v2049 = vld [vmem:[%s2040 + $0x20] sm:$0xf]
        %v2050 = vld [vmem:[%s2040 + $0x24] sm:$0xf]
        %v2051 = vld [vmem:[%s2040 + $0x28] sm:$0xf]
        %v2052 = vld [vmem:[%s2040 + $0x2c] sm:$0xf]
        %v2053 = vld [vmem:[%s2040 + $0x30] sm:$0xf]
        %v2054 = vld [vmem:[%s2040 + $0x34] sm:$0xf]
        %v2055 = vld [vmem:[%s2040 + $0x38] sm:$0xf]
        %v2056 = vld [vmem:[%s2040 + $0x3c] sm:$0xf]
        %v2058 = vshrl.u32 %v2023, 16
        %v2077 = vunpack.c.l.b16 %v2041
        %v2078 = vunpack.c.l.b16 %v2042
        %v2079 = vunpack.c.l.b16 %v2043
        %v2080 = vunpack.c.l.b16 %v2044
        %v2081 = vunpack.c.l.b16 %v2045
        %v2082 = vunpack.c.l.b16 %v2046
        %v2083 = vunpack.c.l.b16 %v2047
        %v2084 = vunpack.c.l.b16 %v2048
        %v2085 = vunpack.c.l.b16 %v2049
        %v2086 = vunpack.c.l.b16 %v2050
        %v2087 = vunpack.c.l.b16 %v2051
        %v2088 = vunpack.c.l.b16 %v2052
        %v2089 = vunpack.c.l.b16 %v2053
        %v2090 = vunpack.c.l.b16 %v2054
        %v2091 = vunpack.c.l.b16 %v2055
        %v2092 = vunpack.c.l.b16 %v2056
        %v2093 = vpack.c.b16 %v2078, %v2077
        %v2094 = vpack.c.b16 %v2080, %v2079
        %v2095 = vpack.c.b16 %v2082, %v2081
        %v2096 = vpack.c.b16 %v2084, %v2083
        %v2097 = vpack.c.b16 %v2086, %v2085
        %v2098 = vpack.c.b16 %v2088, %v2087
        %v2099 = vpack.c.b16 %v2090, %v2089
        %v2100 = vpack.c.b16 %v2092, %v2091
        %2109 = vmatprep.subr.bf16.mxu0 0
        %2110 = vmatpush1.bf16.msra.mxu0 %v2100
        %2111 = vmatprep.subr.bf16.mxu0 0
        %2112 = vmatpush1.bf16.msra.mxu0 %v2099
        %2113 = vmatprep.subr.bf16.mxu0 0
        %2114 = vmatpush1.bf16.msra.mxu0 %v2098
        %2115 = vmatprep.subr.bf16.mxu0 0
        %2116 = vmatpush1.bf16.msra.mxu0 %v2097
        %2117 = vmatprep.subr.bf16.mxu0 0
        %2118 = vmatpush1.bf16.msra.mxu0 %v2096
        %2119 = vmatprep.subr.bf16.mxu0 0
        %2120 = vmatpush1.bf16.msra.mxu0 %v2095
        %2121 = vmatprep.subr.bf16.mxu0 0
        %2122 = vmatpush1.bf16.msra.mxu0 %v2094
        %2123 = vmatprep.subr.bf16.mxu0 0
        %2124 = vmatpush1.bf16.msra.mxu0 %v2093
        %2125 = vmatprep.subr.bf16.mxu0 0
        %2126 = vmatpush2.bf16.msra.mxu0 0
        %2127 = vmatprep.subr.bf16.mxu0 0
        %2128 = vmatpush2.bf16.msra.mxu0 0
        %2129 = vmatprep.subr.bf16.mxu0 0
        %2130 = vmatpush2.bf16.msra.mxu0 0
        %2131 = vmatprep.subr.bf16.mxu0 0
        %2132 = vmatpush2.bf16.msra.mxu0 0
        %2133 = vmatprep.subr.bf16.mxu0 0
        %2134 = vmatpush2.bf16.msra.mxu0 0
        %2135 = vmatprep.subr.bf16.mxu0 0
        %2136 = vmatpush2.bf16.msra.mxu0 0
        %2137 = vmatprep.subr.bf16.mxu0 0
        %2138 = vmatpush2.bf16.msra.mxu0 0
        %2139 = vmatprep.subr.bf16.mxu0 0
        %2140 = vmatpush2.bf16.msra.mxu0 0
        %2141 = vmatprep.mubr.bf16.mxu0 0
        %2142 = vmatmul.mubr.bf16.gmra.mxu0 %v2058
        %v2143 = vpop.f32.mrf.mxu0
        %v2144 = vadd.f32 0.0, %v2143
        %v2145 = vpop.f32.mrf.mxu0
        %v2146 = vpop.f32.mrf.mxu0
        %v2147 = vpop.f32.mrf.mxu0
        %2148 = vdwg.mxu0
        %v2165 = vunpack.c.l.b16 %v2024
        %v2166 = vunpack.c.l.b16 %v2025
        %v2167 = vunpack.c.l.b16 %v2026
        %v2168 = vunpack.c.l.b16 %v2027
        %v2169 = vunpack.c.l.b16 %v2028
        %v2170 = vunpack.c.l.b16 %v2029
        %v2171 = vunpack.c.l.b16 %v2030
        %v2172 = vunpack.c.l.b16 %v2031
        %v2173 = vunpack.c.l.b16 %v2032
        %v2174 = vunpack.c.l.b16 %v2033
        %v2175 = vunpack.c.l.b16 %v2034
        %v2176 = vunpack.c.l.b16 %v2035
        %v2177 = vunpack.c.l.b16 %v2036
        %v2178 = vunpack.c.l.b16 %v2037
        %v2179 = vunpack.c.l.b16 %v2038
        %v2180 = vunpack.c.l.b16 %v2039
        %v2181 = vpack.c.b16 %v2166, %v2165
        %v2182 = vpack.c.b16 %v2168, %v2167
        %v2183 = vpack.c.b16 %v2170, %v2169
        %v2184 = vpack.c.b16 %v2172, %v2171
        %v2185 = vpack.c.b16 %v2174, %v2173
        %v2186 = vpack.c.b16 %v2176, %v2175
        %v2187 = vpack.c.b16 %v2178, %v2177
        %v2188 = vpack.c.b16 %v2180, %v2179
        %2197 = vmatprep.subr.bf16.mxu0 0
        %2198 = vmatpush1.bf16.msra.mxu0 %v2188
        %2199 = vmatprep.subr.bf16.mxu0 0
        %2200 = vmatpush1.bf16.msra.mxu0 %v2187
        %2201 = vmatprep.subr.bf16.mxu0 0
        %2202 = vmatpush1.bf16.msra.mxu0 %v2186
        %2203 = vmatprep.subr.bf16.mxu0 0
        %2204 = vmatpush1.bf16.msra.mxu0 %v2185
        %2205 = vmatprep.subr.bf16.mxu0 0
        %2206 = vmatpush1.bf16.msra.mxu0 %v2184
        %2207 = vmatprep.subr.bf16.mxu0 0
        %2208 = vmatpush1.bf16.msra.mxu0 %v2183
        %2209 = vmatprep.subr.bf16.mxu0 0
        %2210 = vmatpush1.bf16.msra.mxu0 %v2182
        %2211 = vmatprep.subr.bf16.mxu0 0
        %2212 = vmatpush1.bf16.msra.mxu0 %v2181
        %2213 = vmatprep.subr.bf16.mxu0 0
        %2214 = vmatpush2.bf16.msra.mxu0 0
        %2215 = vmatprep.subr.bf16.mxu0 0
        %2216 = vmatpush2.bf16.msra.mxu0 0
        %2217 = vmatprep.subr.bf16.mxu0 0
        %2218 = vmatpush2.bf16.msra.mxu0 0
        %2219 = vmatprep.subr.bf16.mxu0 0
        %2220 = vmatpush2.bf16.msra.mxu0 0
        %2221 = vmatprep.subr.bf16.mxu0 0
        %2222 = vmatpush2.bf16.msra.mxu0 0
        %2223 = vmatprep.subr.bf16.mxu0 0
        %2224 = vmatpush2.bf16.msra.mxu0 0
        %2225 = vmatprep.subr.bf16.mxu0 0
        %2226 = vmatpush2.bf16.msra.mxu0 0
        %2227 = vmatprep.subr.bf16.mxu0 0
        %2228 = vmatpush2.bf16.msra.mxu0 0
        %2229 = vmatprep.mubr.bf16.mxu0 0
        %2230 = vmatmul.mubr.bf16.gmra.mxu0 %v2023
        %v2231 = vpop.f32.mrf.mxu0
        %v2232 = vadd.f32 %v2144, %v2231
        %v2233 = vpop.f32.mrf.mxu0
        %v2234 = vpop.f32.mrf.mxu0
        %v2235 = vpop.f32.mrf.mxu0
        %2236 = vdwg.mxu0
        %s2237 = scalar_lea.vmem %s9, 128
        %v2238 = vld [vmem:[%s2237] sm:$0xf]
        %v2239 = vld [vmem:[%s2237 + $0x4] sm:$0xf]
        %v2240 = vld [vmem:[%s2237 + $0x8] sm:$0xf]
        %v2241 = vld [vmem:[%s2237 + $0xc] sm:$0xf]
        %v2242 = vld [vmem:[%s2237 + $0x10] sm:$0xf]
        %v2243 = vld [vmem:[%s2237 + $0x14] sm:$0xf]
        %v2244 = vld [vmem:[%s2237 + $0x18] sm:$0xf]
        %v2245 = vld [vmem:[%s2237 + $0x1c] sm:$0xf]
        %v2246 = vld [vmem:[%s2237 + $0x20] sm:$0xf]
        %v2247 = vld [vmem:[%s2237 + $0x24] sm:$0xf]
        %v2248 = vld [vmem:[%s2237 + $0x28] sm:$0xf]
        %v2249 = vld [vmem:[%s2237 + $0x2c] sm:$0xf]
        %v2250 = vld [vmem:[%s2237 + $0x30] sm:$0xf]
        %v2251 = vld [vmem:[%s2237 + $0x34] sm:$0xf]
        %v2252 = vld [vmem:[%s2237 + $0x38] sm:$0xf]
        %v2253 = vld [vmem:[%s2237 + $0x3c] sm:$0xf]
        %v2255 = vrot.slane %v2023, 1
        %v2273 = vunpack.c.l.b16 %v2238
        %v2274 = vunpack.c.l.b16 %v2239
        %v2275 = vunpack.c.l.b16 %v2240
        %v2276 = vunpack.c.l.b16 %v2241
        %v2277 = vunpack.c.l.b16 %v2242
        %v2278 = vunpack.c.l.b16 %v2243
        %v2279 = vunpack.c.l.b16 %v2244
        %v2280 = vunpack.c.l.b16 %v2245
        %v2281 = vunpack.c.l.b16 %v2246
        %v2282 = vunpack.c.l.b16 %v2247
        %v2283 = vunpack.c.l.b16 %v2248
        %v2284 = vunpack.c.l.b16 %v2249
        %v2285 = vunpack.c.l.b16 %v2250
        %v2286 = vunpack.c.l.b16 %v2251
        %v2287 = vunpack.c.l.b16 %v2252
        %v2288 = vunpack.c.l.b16 %v2253
        %v2289 = vpack.c.b16 %v2274, %v2273
        %v2290 = vpack.c.b16 %v2276, %v2275
        %v2291 = vpack.c.b16 %v2278, %v2277
        %v2292 = vpack.c.b16 %v2280, %v2279
        %v2293 = vpack.c.b16 %v2282, %v2281
        %v2294 = vpack.c.b16 %v2284, %v2283
        %v2295 = vpack.c.b16 %v2286, %v2285
        %v2296 = vpack.c.b16 %v2288, %v2287
        %2305 = vmatprep.subr.bf16.mxu0 0
        %2306 = vmatpush1.bf16.msra.mxu0 %v2296
        %2307 = vmatprep.subr.bf16.mxu0 0
        %2308 = vmatpush1.bf16.msra.mxu0 %v2295
        %2309 = vmatprep.subr.bf16.mxu0 0
        %2310 = vmatpush1.bf16.msra.mxu0 %v2294
        %2311 = vmatprep.subr.bf16.mxu0 0
        %2312 = vmatpush1.bf16.msra.mxu0 %v2293
        %2313 = vmatprep.subr.bf16.mxu0 0
        %2314 = vmatpush1.bf16.msra.mxu0 %v2292
        %2315 = vmatprep.subr.bf16.mxu0 0
        %2316 = vmatpush1.bf16.msra.mxu0 %v2291
        %2317 = vmatprep.subr.bf16.mxu0 0
        %2318 = vmatpush1.bf16.msra.mxu0 %v2290
        %2319 = vmatprep.subr.bf16.mxu0 0
        %2320 = vmatpush1.bf16.msra.mxu0 %v2289
        %2321 = vmatprep.subr.bf16.mxu0 0
        %2322 = vmatpush2.bf16.msra.mxu0 0
        %2323 = vmatprep.subr.bf16.mxu0 0
        %2324 = vmatpush2.bf16.msra.mxu0 0
        %2325 = vmatprep.subr.bf16.mxu0 0
        %2326 = vmatpush2.bf16.msra.mxu0 0
        %2327 = vmatprep.subr.bf16.mxu0 0
        %2328 = vmatpush2.bf16.msra.mxu0 0
        %2329 = vmatprep.subr.bf16.mxu0 0
        %2330 = vmatpush2.bf16.msra.mxu0 0
        %2331 = vmatprep.subr.bf16.mxu0 0
        %2332 = vmatpush2.bf16.msra.mxu0 0
        %2333 = vmatprep.subr.bf16.mxu0 0
        %2334 = vmatpush2.bf16.msra.mxu0 0
        %2335 = vmatprep.subr.bf16.mxu0 0
        %2336 = vmatpush2.bf16.msra.mxu0 0
        %2337 = vmatprep.mubr.bf16.mxu0 0
        %2338 = vmatmul.mubr.bf16.gmra.mxu0 %v2255
        %v2339 = vpop.f32.mrf.mxu0
        %v2340 = vadd.f32 0.0, %v2339
        %v2341 = vpop.f32.mrf.mxu0
        %v2342 = vpop.f32.mrf.mxu0
        %v2343 = vpop.f32.mrf.mxu0
        %2344 = vdwg.mxu0
        %v2345 = vadd.f32 %v2232, %v2340
        %s2346 = scalar_lea.vmem %s9, 192
        %v2347 = vld [vmem:[%s2346] sm:$0xf]
        %v2348 = vld [vmem:[%s2346 + $0x4] sm:$0xf]
        %v2349 = vld [vmem:[%s2346 + $0x8] sm:$0xf]
        %v2350 = vld [vmem:[%s2346 + $0xc] sm:$0xf]
        %v2351 = vld [vmem:[%s2346 + $0x10] sm:$0xf]
        %v2352 = vld [vmem:[%s2346 + $0x14] sm:$0xf]
        %v2353 = vld [vmem:[%s2346 + $0x18] sm:$0xf]
        %v2354 = vld [vmem:[%s2346 + $0x1c] sm:$0xf]
        %v2355 = vld [vmem:[%s2346 + $0x20] sm:$0xf]
        %v2356 = vld [vmem:[%s2346 + $0x24] sm:$0xf]
        %v2357 = vld [vmem:[%s2346 + $0x28] sm:$0xf]
        %v2358 = vld [vmem:[%s2346 + $0x2c] sm:$0xf]
        %v2359 = vld [vmem:[%s2346 + $0x30] sm:$0xf]
        %v2360 = vld [vmem:[%s2346 + $0x34] sm:$0xf]
        %v2361 = vld [vmem:[%s2346 + $0x38] sm:$0xf]
        %v2362 = vld [vmem:[%s2346 + $0x3c] sm:$0xf]
        %v2363 = vrot.slane %v2058, 1
        %v2381 = vunpack.c.l.b16 %v2347
        %v2382 = vunpack.c.l.b16 %v2348
        %v2383 = vunpack.c.l.b16 %v2349
        %v2384 = vunpack.c.l.b16 %v2350
        %v2385 = vunpack.c.l.b16 %v2351
        %v2386 = vunpack.c.l.b16 %v2352
        %v2387 = vunpack.c.l.b16 %v2353
        %v2388 = vunpack.c.l.b16 %v2354
        %v2389 = vunpack.c.l.b16 %v2355
        %v2390 = vunpack.c.l.b16 %v2356
        %v2391 = vunpack.c.l.b16 %v2357
        %v2392 = vunpack.c.l.b16 %v2358
        %v2393 = vunpack.c.l.b16 %v2359
        %v2394 = vunpack.c.l.b16 %v2360
        %v2395 = vunpack.c.l.b16 %v2361
        %v2396 = vunpack.c.l.b16 %v2362
        %v2397 = vpack.c.b16 %v2382, %v2381
        %v2398 = vpack.c.b16 %v2384, %v2383
        %v2399 = vpack.c.b16 %v2386, %v2385
        %v2400 = vpack.c.b16 %v2388, %v2387
        %v2401 = vpack.c.b16 %v2390, %v2389
        %v2402 = vpack.c.b16 %v2392, %v2391
        %v2403 = vpack.c.b16 %v2394, %v2393
        %v2404 = vpack.c.b16 %v2396, %v2395
        %2413 = vmatprep.subr.bf16.mxu0 0
        %2414 = vmatpush1.bf16.msra.mxu0 %v2404
        %2415 = vmatprep.subr.bf16.mxu0 0
        %2416 = vmatpush1.bf16.msra.mxu0 %v2403
        %2417 = vmatprep.subr.bf16.mxu0 0
        %2418 = vmatpush1.bf16.msra.mxu0 %v2402
        %2419 = vmatprep.subr.bf16.mxu0 0
        %2420 = vmatpush1.bf16.msra.mxu0 %v2401
        %2421 = vmatprep.subr.bf16.mxu0 0
        %2422 = vmatpush1.bf16.msra.mxu0 %v2400
        %2423 = vmatprep.subr.bf16.mxu0 0
        %2424 = vmatpush1.bf16.msra.mxu0 %v2399
        %2425 = vmatprep.subr.bf16.mxu0 0
        %2426 = vmatpush1.bf16.msra.mxu0 %v2398
        %2427 = vmatprep.subr.bf16.mxu0 0
        %2428 = vmatpush1.bf16.msra.mxu0 %v2397
        %2429 = vmatprep.subr.bf16.mxu0 0
        %2430 = vmatpush2.bf16.msra.mxu0 0
        %2431 = vmatprep.subr.bf16.mxu0 0
        %2432 = vmatpush2.bf16.msra.mxu0 0
        %2433 = vmatprep.subr.bf16.mxu0 0
        %2434 = vmatpush2.bf16.msra.mxu0 0
        %2435 = vmatprep.subr.bf16.mxu0 0
        %2436 = vmatpush2.bf16.msra.mxu0 0
        %2437 = vmatprep.subr.bf16.mxu0 0
        %2438 = vmatpush2.bf16.msra.mxu0 0
        %2439 = vmatprep.subr.bf16.mxu0 0
        %2440 = vmatpush2.bf16.msra.mxu0 0
        %2441 = vmatprep.subr.bf16.mxu0 0
        %2442 = vmatpush2.bf16.msra.mxu0 0
        %2443 = vmatprep.subr.bf16.mxu0 0
        %2444 = vmatpush2.bf16.msra.mxu0 0
        %2445 = vmatprep.mubr.bf16.mxu0 0
        %2446 = vmatmul.mubr.bf16.gmra.mxu0 %v2363
        %v2447 = vpop.f32.mrf.mxu0
        %v2448 = vadd.f32 0.0, %v2447
        %v2449 = vpop.f32.mrf.mxu0
        %v2450 = vpop.f32.mrf.mxu0
        %v2451 = vpop.f32.mrf.mxu0
        %2452 = vdwg.mxu0
        %v2453 = vadd.f32 %v2345, %v2448
        %s2454 = scalar_lea.vmem %s9, 256
        %v2455 = vld [vmem:[%s2454] sm:$0xf]
        %v2456 = vld [vmem:[%s2454 + $0x4] sm:$0xf]
        %v2457 = vld [vmem:[%s2454 + $0x8] sm:$0xf]
        %v2458 = vld [vmem:[%s2454 + $0xc] sm:$0xf]
        %v2459 = vld [vmem:[%s2454 + $0x10] sm:$0xf]
        %v2460 = vld [vmem:[%s2454 + $0x14] sm:$0xf]
        %v2461 = vld [vmem:[%s2454 + $0x18] sm:$0xf]
        %v2462 = vld [vmem:[%s2454 + $0x1c] sm:$0xf]
        %v2463 = vld [vmem:[%s2454 + $0x20] sm:$0xf]
        %v2464 = vld [vmem:[%s2454 + $0x24] sm:$0xf]
        %v2465 = vld [vmem:[%s2454 + $0x28] sm:$0xf]
        %v2466 = vld [vmem:[%s2454 + $0x2c] sm:$0xf]
        %v2467 = vld [vmem:[%s2454 + $0x30] sm:$0xf]
        %v2468 = vld [vmem:[%s2454 + $0x34] sm:$0xf]
        %v2469 = vld [vmem:[%s2454 + $0x38] sm:$0xf]
        %v2470 = vld [vmem:[%s2454 + $0x3c] sm:$0xf]
        %v2471 = vrot.slane %v2023, 2
        %v2489 = vunpack.c.l.b16 %v2455
        %v2490 = vunpack.c.l.b16 %v2456
        %v2491 = vunpack.c.l.b16 %v2457
        %v2492 = vunpack.c.l.b16 %v2458
        %v2493 = vunpack.c.l.b16 %v2459
        %v2494 = vunpack.c.l.b16 %v2460
        %v2495 = vunpack.c.l.b16 %v2461
        %v2496 = vunpack.c.l.b16 %v2462
        %v2497 = vunpack.c.l.b16 %v2463
        %v2498 = vunpack.c.l.b16 %v2464
        %v2499 = vunpack.c.l.b16 %v2465
        %v2500 = vunpack.c.l.b16 %v2466
        %v2501 = vunpack.c.l.b16 %v2467
        %v2502 = vunpack.c.l.b16 %v2468
        %v2503 = vunpack.c.l.b16 %v2469
        %v2504 = vunpack.c.l.b16 %v2470
        %v2505 = vpack.c.b16 %v2490, %v2489
        %v2506 = vpack.c.b16 %v2492, %v2491
        %v2507 = vpack.c.b16 %v2494, %v2493
        %v2508 = vpack.c.b16 %v2496, %v2495
        %v2509 = vpack.c.b16 %v2498, %v2497
        %v2510 = vpack.c.b16 %v2500, %v2499
        %v2511 = vpack.c.b16 %v2502, %v2501
        %v2512 = vpack.c.b16 %v2504, %v2503
        %2521 = vmatprep.subr.bf16.mxu0 0
        %2522 = vmatpush1.bf16.msra.mxu0 %v2512
        %2523 = vmatprep.subr.bf16.mxu0 0
        %2524 = vmatpush1.bf16.msra.mxu0 %v2511
        %2525 = vmatprep.subr.bf16.mxu0 0
        %2526 = vmatpush1.bf16.msra.mxu0 %v2510
        %2527 = vmatprep.subr.bf16.mxu0 0
        %2528 = vmatpush1.bf16.msra.mxu0 %v2509
        %2529 = vmatprep.subr.bf16.mxu0 0
        %2530 = vmatpush1.bf16.msra.mxu0 %v2508
        %2531 = vmatprep.subr.bf16.mxu0 0
        %2532 = vmatpush1.bf16.msra.mxu0 %v2507
        %2533 = vmatprep.subr.bf16.mxu0 0
        %2534 = vmatpush1.bf16.msra.mxu0 %v2506
        %2535 = vmatprep.subr.bf16.mxu0 0
        %2536 = vmatpush1.bf16.msra.mxu0 %v2505
        %2537 = vmatprep.subr.bf16.mxu0 0
        %2538 = vmatpush2.bf16.msra.mxu0 0
        %2539 = vmatprep.subr.bf16.mxu0 0
        %2540 = vmatpush2.bf16.msra.mxu0 0
        %2541 = vmatprep.subr.bf16.mxu0 0
        %2542 = vmatpush2.bf16.msra.mxu0 0
        %2543 = vmatprep.subr.bf16.mxu0 0
        %2544 = vmatpush2.bf16.msra.mxu0 0
        %2545 = vmatprep.subr.bf16.mxu0 0
        %2546 = vmatpush2.bf16.msra.mxu0 0
        %2547 = vmatprep.subr.bf16.mxu0 0
        %2548 = vmatpush2.bf16.msra.mxu0 0
        %2549 = vmatprep.subr.bf16.mxu0 0
        %2550 = vmatpush2.bf16.msra.mxu0 0
        %2551 = vmatprep.subr.bf16.mxu0 0
        %2552 = vmatpush2.bf16.msra.mxu0 0
        %2553 = vmatprep.mubr.bf16.mxu0 0
        %2554 = vmatmul.mubr.bf16.gmra.mxu0 %v2471
        %v2555 = vpop.f32.mrf.mxu0
        %v2556 = vadd.f32 0.0, %v2555
        %v2557 = vpop.f32.mrf.mxu0
        %v2558 = vpop.f32.mrf.mxu0
        %v2559 = vpop.f32.mrf.mxu0
        %2560 = vdwg.mxu0
        %v2561 = vadd.f32 %v2453, %v2556
        %v2562 = vld [vmem:[%s10] sm:$0x1]
        %v2563 = vadd.f32 %v2561, %v2562
        %v2564 = vmax.f32 %v2563, 0.0
        %v2565 = vpack.c.bf16 %v2564, %v2564
        %v2566 = vld [vmem:[#allocation7] sm:$0xf]
        %v2567 = vld [vmem:[#allocation7 + $0x4] sm:$0xf]
        %v2568 = vld [vmem:[#allocation7 + $0x8] sm:$0xf]
        %v2569 = vld [vmem:[#allocation7 + $0xc] sm:$0xf]
        %v2570 = vld [vmem:[#allocation7 + $0x10] sm:$0xf]
        %v2571 = vld [vmem:[#allocation7 + $0x14] sm:$0xf]
        %v2572 = vld [vmem:[#allocation7 + $0x18] sm:$0xf]
        %v2573 = vld [vmem:[#allocation7 + $0x1c] sm:$0xf]
        %v2574 = vld [vmem:[#allocation7 + $0x20] sm:$0xf]
        %v2575 = vld [vmem:[#allocation7 + $0x24] sm:$0xf]
        %v2576 = vld [vmem:[#allocation7 + $0x28] sm:$0xf]
        %v2577 = vld [vmem:[#allocation7 + $0x2c] sm:$0xf]
        %v2578 = vld [vmem:[#allocation7 + $0x30] sm:$0xf]
        %v2579 = vld [vmem:[#allocation7 + $0x34] sm:$0xf]
        %v2580 = vld [vmem:[#allocation7 + $0x38] sm:$0xf]
        %v2581 = vld [vmem:[#allocation7 + $0x3c] sm:$0xf]
        %v2582 = vld [vmem:[%s12] sm:$0x1]
        %v2599 = vunpack.c.l.b16 %v2566
        %v2600 = vunpack.c.l.b16 %v2567
        %v2601 = vunpack.c.l.b16 %v2568
        %v2602 = vunpack.c.l.b16 %v2569
        %v2603 = vunpack.c.l.b16 %v2570
        %v2604 = vunpack.c.l.b16 %v2571
        %v2605 = vunpack.c.l.b16 %v2572
        %v2606 = vunpack.c.l.b16 %v2573
        %v2607 = vunpack.c.l.b16 %v2574
        %v2608 = vunpack.c.l.b16 %v2575
        %v2609 = vunpack.c.l.b16 %v2576
        %v2610 = vunpack.c.l.b16 %v2577
        %v2611 = vunpack.c.l.b16 %v2578
        %v2612 = vunpack.c.l.b16 %v2579
        %v2613 = vunpack.c.l.b16 %v2580
        %v2614 = vunpack.c.l.b16 %v2581
        %v2615 = vpack.c.b16 %v2600, %v2599
        %v2616 = vpack.c.b16 %v2602, %v2601
        %v2617 = vpack.c.b16 %v2604, %v2603
        %v2618 = vpack.c.b16 %v2606, %v2605
        %v2619 = vpack.c.b16 %v2608, %v2607
        %v2620 = vpack.c.b16 %v2610, %v2609
        %v2621 = vpack.c.b16 %v2612, %v2611
        %v2622 = vpack.c.b16 %v2614, %v2613
        %2631 = vmatprep.subr.bf16.mxu0 0
        %2632 = vmatpush1.bf16.msra.mxu0 %v2622
        %2633 = vmatprep.subr.bf16.mxu0 0
        %2634 = vmatpush1.bf16.msra.mxu0 %v2621
        %2635 = vmatprep.subr.bf16.mxu0 0
        %2636 = vmatpush1.bf16.msra.mxu0 %v2620
        %2637 = vmatprep.subr.bf16.mxu0 0
        %2638 = vmatpush1.bf16.msra.mxu0 %v2619
        %2639 = vmatprep.subr.bf16.mxu0 0
        %2640 = vmatpush1.bf16.msra.mxu0 %v2618
        %2641 = vmatprep.subr.bf16.mxu0 0
        %2642 = vmatpush1.bf16.msra.mxu0 %v2617
        %2643 = vmatprep.subr.bf16.mxu0 0
        %2644 = vmatpush1.bf16.msra.mxu0 %v2616
        %2645 = vmatprep.subr.bf16.mxu0 0
        %2646 = vmatpush1.bf16.msra.mxu0 %v2615
        %2647 = vmatprep.subr.bf16.mxu0 0
        %2648 = vmatpush2.bf16.msra.mxu0 0
        %2649 = vmatprep.subr.bf16.mxu0 0
        %2650 = vmatpush2.bf16.msra.mxu0 0
        %2651 = vmatprep.subr.bf16.mxu0 0
        %2652 = vmatpush2.bf16.msra.mxu0 0
        %2653 = vmatprep.subr.bf16.mxu0 0
        %2654 = vmatpush2.bf16.msra.mxu0 0
        %2655 = vmatprep.subr.bf16.mxu0 0
        %2656 = vmatpush2.bf16.msra.mxu0 0
        %2657 = vmatprep.subr.bf16.mxu0 0
        %2658 = vmatpush2.bf16.msra.mxu0 0
        %2659 = vmatprep.subr.bf16.mxu0 0
        %2660 = vmatpush2.bf16.msra.mxu0 0
        %2661 = vmatprep.subr.bf16.mxu0 0
        %2662 = vmatpush2.bf16.msra.mxu0 0
        %2663 = vmatprep.mubr.bf16.mxu0 0
        %2664 = vmatmul.mubr.bf16.gmra.mxu0 %v2565
        %v2665 = vpop.f32.mrf.mxu0
        %v2666 = vadd.f32 %v2582, %v2665
        %v2667 = vpop.f32.mrf.mxu0
        %v2668 = vpop.f32.mrf.mxu0
        %v2669 = vpop.f32.mrf.mxu0
        %2670 = vdwg.mxu0
        %v2671 = vmax.f32 %v2666, 0.0
        %v2672 = vpack.c.bf16 %v2671, %v2671
        %v2673 = vld [vmem:[#allocation8] sm:$0xf]
        %v2674 = vld [vmem:[#allocation8 + $0x4] sm:$0xf]
        %v2675 = vld [vmem:[#allocation8 + $0x8] sm:$0xf]
        %v2676 = vld [vmem:[#allocation8 + $0xc] sm:$0xf]
        %v2677 = vld [vmem:[#allocation8 + $0x10] sm:$0xf]
        %v2678 = vld [vmem:[#allocation8 + $0x14] sm:$0xf]
        %v2679 = vld [vmem:[#allocation8 + $0x18] sm:$0xf]
        %v2680 = vld [vmem:[#allocation8 + $0x1c] sm:$0xf]
        %v2681 = vld [vmem:[#allocation8 + $0x20] sm:$0xf]
        %v2682 = vld [vmem:[#allocation8 + $0x24] sm:$0xf]
        %v2683 = vld [vmem:[#allocation8 + $0x28] sm:$0xf]
        %v2684 = vld [vmem:[#allocation8 + $0x2c] sm:$0xf]
        %v2685 = vld [vmem:[#allocation8 + $0x30] sm:$0xf]
        %v2686 = vld [vmem:[#allocation8 + $0x34] sm:$0xf]
        %v2687 = vld [vmem:[#allocation8 + $0x38] sm:$0xf]
        %v2688 = vld [vmem:[#allocation8 + $0x3c] sm:$0xf]
        %v2689 = vld [vmem:[%s14] sm:$0x1]
        %v2706 = vunpack.c.l.b16 %v2673
        %v2707 = vunpack.c.l.b16 %v2674
        %v2708 = vunpack.c.l.b16 %v2675
        %v2709 = vunpack.c.l.b16 %v2676
        %v2710 = vunpack.c.l.b16 %v2677
        %v2711 = vunpack.c.l.b16 %v2678
        %v2712 = vunpack.c.l.b16 %v2679
        %v2713 = vunpack.c.l.b16 %v2680
        %v2714 = vunpack.c.l.b16 %v2681
        %v2715 = vunpack.c.l.b16 %v2682
        %v2716 = vunpack.c.l.b16 %v2683
        %v2717 = vunpack.c.l.b16 %v2684
        %v2718 = vunpack.c.l.b16 %v2685
        %v2719 = vunpack.c.l.b16 %v2686
        %v2720 = vunpack.c.l.b16 %v2687
        %v2721 = vunpack.c.l.b16 %v2688
        %v2722 = vpack.c.b16 %v2707, %v2706
        %v2723 = vpack.c.b16 %v2709, %v2708
        %v2724 = vpack.c.b16 %v2711, %v2710
        %v2725 = vpack.c.b16 %v2713, %v2712
        %v2726 = vpack.c.b16 %v2715, %v2714
        %v2727 = vpack.c.b16 %v2717, %v2716
        %v2728 = vpack.c.b16 %v2719, %v2718
        %v2729 = vpack.c.b16 %v2721, %v2720
        %2738 = vmatprep.subr.bf16.mxu0 0
        %2739 = vmatpush1.bf16.msra.mxu0 %v2729
        %2740 = vmatprep.subr.bf16.mxu0 0
        %2741 = vmatpush1.bf16.msra.mxu0 %v2728
        %2742 = vmatprep.subr.bf16.mxu0 0
        %2743 = vmatpush1.bf16.msra.mxu0 %v2727
        %2744 = vmatprep.subr.bf16.mxu0 0
        %2745 = vmatpush1.bf16.msra.mxu0 %v2726
        %2746 = vmatprep.subr.bf16.mxu0 0
        %2747 = vmatpush1.bf16.msra.mxu0 %v2725
        %2748 = vmatprep.subr.bf16.mxu0 0
        %2749 = vmatpush1.bf16.msra.mxu0 %v2724
        %2750 = vmatprep.subr.bf16.mxu0 0
        %2751 = vmatpush1.bf16.msra.mxu0 %v2723
        %2752 = vmatprep.subr.bf16.mxu0 0
        %2753 = vmatpush1.bf16.msra.mxu0 %v2722
        %2754 = vmatprep.subr.bf16.mxu0 0
        %2755 = vmatpush2.bf16.msra.mxu0 0
        %2756 = vmatprep.subr.bf16.mxu0 0
        %2757 = vmatpush2.bf16.msra.mxu0 0
        %2758 = vmatprep.subr.bf16.mxu0 0
        %2759 = vmatpush2.bf16.msra.mxu0 0
        %2760 = vmatprep.subr.bf16.mxu0 0
        %2761 = vmatpush2.bf16.msra.mxu0 0
        %2762 = vmatprep.subr.bf16.mxu0 0
        %2763 = vmatpush2.bf16.msra.mxu0 0
        %2764 = vmatprep.subr.bf16.mxu0 0
        %2765 = vmatpush2.bf16.msra.mxu0 0
        %2766 = vmatprep.subr.bf16.mxu0 0
        %2767 = vmatpush2.bf16.msra.mxu0 0
        %2768 = vmatprep.subr.bf16.mxu0 0
        %2769 = vmatpush2.bf16.msra.mxu0 0
        %2770 = vmatprep.mubr.bf16.mxu0 0
        %2771 = vmatmul.mubr.bf16.gmra.mxu0 %v2672
        %v2772 = vpop.f32.mrf.mxu0
        %v2773 = vadd.f32 %v2689, %v2772
        %v2774 = vpop.f32.mrf.mxu0
        %v2775 = vpop.f32.mrf.mxu0
        %v2776 = vpop.f32.mrf.mxu0
        %2777 = vdwg.mxu0
        %2778 = vst [vmem:[%s545] sm:$0x1] %v2773
        %s2779 = sand.u32 %s360, 1
        %s2780 = scalar_lea.sflag [#allocation4], %s2779
        %s2781 = sand.u32 %s360, 1
        %s2782 = scalar_lea.vmem [#allocation10], %s2781
        // Predicated region
        $region97: #{lenet_forward.1} parent=79 // pred_check
          %p2783 = pneg %p370
        $region98: #{lenet_forward.1} parent=79 // pred_check_branch
          %2785 = sbr.rel (%p2783) target = $region100
        $region99: #{lenet_forward.1} parent=79 // pred_region
          %s2787 = ssub.s32 16, 16
          %2788 = vsyncadd %s2780, %s2787
          %s2789 = smul.addr %s32, 16
          %s2790 = scalar_lea.hbm %s15, %s2789
          %s2792 = sshll.u32 %s2782, 4
          %s2793 = int_to_ptr.vmem [resolvable:$true] %s2792
          %2795 = dma.vmem_to_hbm [thread:$0]  %s2793, 16, %s2790, %s2780
        $region100: #{lenet_forward.1} parent=79 // pred_fallthru
          _
      $region80: #{lenet_forward.1} parent=5 // pred_fallthru
        _
      %p2796 = scmp.le.s32.totalorder 2, %s27
      // Predicated region
      $region101: #{lenet_forward.1} parent=5 // pred_check
        %p2797 = pneg %p2796
      $region102: #{lenet_forward.1} parent=5 // pred_check_branch
        %2799 = sbr.rel (%p2797) target = $region104
      $region103: #{lenet_forward.1} parent=5 // pred_region
        %s2800 = ssub.s32 %s27, 2
        // Predicated region
        $region105: #{lenet_forward.1} parent=103 // pred_check
          %p2801 = pneg %p376
        $region106: #{lenet_forward.1} parent=103 // pred_check_branch
          %2803 = sbr.rel (%p2801) target = $region108
        $region107: #{lenet_forward.1} parent=103 // pred_region
          %s2804 = sand.u32 %s361, 1
          %s2805 = scalar_lea.sflag [#allocation4], %s2804
          %s2806 = sand.u32 %s361, 1
          %s2807 = scalar_lea.vmem [#allocation10], %s2806
          %2808 = dma.done %s2805, 16
        $region108: #{lenet_forward.1} parent=103 // pred_fallthru
          _
      $region104: #{lenet_forward.1} parent=5 // pred_fallthru
        _
    $region6: #{lenet_forward.1} parent=1 // loop_footer
      %s31 = sadd.s32 1, %s27
    $region7: #{lenet_forward.1} parent=1 // loop_footer_branch
      %26 = sbr.rel target = $region3
    $region8: #{lenet_forward.1} parent=1 // loop_exit
      _
    %2809 = vsyncpa [#allocation3], 1
    %s2810 = scalar_lea.sflag [#allocation3], 1
    %2811 = vsyncpa %s2810, 1
    %2812 = vsyncpa [#allocation6], 1
    %2813 = vsyncpa [#allocation9], 1
    %2814 = vsyncpa [#allocation4], 1
    %s2815 = scalar_lea.sflag [#allocation4], 1
    %2816 = vsyncpa %s2815, 1

</llo_original>
